<compile_context>
chip_gen: v7x
topology: tpu7x:2x2x1
jax: 0.10.0
libtpu: 0.0.40
codegen_flags: <defaults>
</compile_context>

<pallas_src>
import functools

import jax
import jax.numpy as jnp
from jax import lax
from jax.experimental import pallas as pl
from jax.experimental.pallas import tpu as pltpu


# ---------------------------------------------------------------------------
# Kernel 1: Caffe-style RoI max pooling, NHWC, separable, one RoI per grid step
#   scalar-prefetch args (SMEM): batch index + flat 1-D bin boundary tables
#   x block: the (1, H, W, C) slice of the batch image this RoI belongs to,
#            selected data-dependently through the index_map.
# ---------------------------------------------------------------------------
def _roi_pool_kernel(roi_size, bidx_ref, hs_ref, he_ref, ws_ref, we_ref,
                     x_ref, out_ref):
    del bidx_ref  # only used by the index_map
    r = pl.program_id(0)
    feat = x_ref[0]                                   # (H, W, C), channels on lanes
    H, W, C = feat.shape
    neg = jnp.finfo(jnp.float32).min

    w_iota = lax.broadcasted_iota(jnp.int32, (W, 1), 0)   # (W, 1)
    h_iota = lax.broadcasted_iota(jnp.int32, (H, 1), 0)   # (H, 1)

    # Stage 1: masked max over W for each pw bin -> (roi_size, H, C)
    cols = []
    for pw in range(roi_size):
        ws = ws_ref[r * roi_size + pw]
        we = we_ref[r * roi_size + pw]
        mw = (w_iota >= ws) & (w_iota < we)               # (W, 1)
        cols.append(jnp.max(jnp.where(mw[None], feat, neg), axis=1))   # (H, C)
    col_max = jnp.stack(cols, axis=0)                     # (roi_size, H, C)

    # Stage 2: masked max over H for each ph bin -> lane-dense (roi_size, C)
    for ph in range(roi_size):
        hs = hs_ref[r * roi_size + ph]
        he = he_ref[r * roi_size + ph]
        mh = (h_iota >= hs) & (h_iota < he)               # (H, 1)
        row = jnp.max(jnp.where(mh[None], col_max, neg), axis=1)       # (roi_size, C)
        # Empty (clipped-away) bins stay at the sentinel -> 0, matching the
        # reference RoIPool.  (Real features never equal float32 min.)
        row = jnp.where(row > neg, row, 0.0)
        out_ref[0, ph * roi_size:(ph + 1) * roi_size, :] = row.astype(out_ref.dtype)


def roi_pool(x, xy_indices_and_rois, roi_size, spatial_scale):
    """x: (N, C, H, W) float32.  xy rois: (R, 5) = [batch_idx, x1, y1, x2, y2].

    Returns pooled features as (R, roi_size*roi_size, C) with C lane-dense.
    """
    N, C, H, W = x.shape
    R = xy_indices_and_rois.shape[0]
    x_nhwc = jnp.transpose(x, (0, 2, 3, 1))          # NCHW -> NHWC (layout plumbing)

    bidx = xy_indices_and_rois[:, 0].astype(jnp.int32)

    def rnd(v):  # round half away from zero (like the reference CUDA kernel)
        return jnp.floor(v * spatial_scale + 0.5).astype(jnp.int32)

    x1 = rnd(xy_indices_and_rois[:, 1])
    y1 = rnd(xy_indices_and_rois[:, 2])
    x2 = rnd(xy_indices_and_rois[:, 3])
    y2 = rnd(xy_indices_and_rois[:, 4])
    roi_w = jnp.maximum(x2 - x1 + 1, 1).astype(jnp.float32)
    roi_h = jnp.maximum(y2 - y1 + 1, 1).astype(jnp.float32)
    bin_h = roi_h / roi_size
    bin_w = roi_w / roi_size

    p = jnp.arange(roi_size, dtype=jnp.float32)
    hs = jnp.clip(jnp.floor(p[None] * bin_h[:, None]).astype(jnp.int32) + y1[:, None], 0, H)
    he = jnp.clip(jnp.ceil((p[None] + 1.0) * bin_h[:, None]).astype(jnp.int32) + y1[:, None], 0, H)
    ws = jnp.clip(jnp.floor(p[None] * bin_w[:, None]).astype(jnp.int32) + x1[:, None], 0, W)
    we = jnp.clip(jnp.ceil((p[None] + 1.0) * bin_w[:, None]).astype(jnp.int32) + x1[:, None], 0, W)

    # Sort RoIs by batch index so consecutive grid steps keep the same input
    # block (Pallas skips the image DMA when the block index is unchanged).
    order = jnp.argsort(bidx)
    inv = jnp.argsort(order)
    bidx_s = bidx[order]
    hs_s = hs[order].reshape(-1)     # flat 1-D SMEM tables (no 128-lane padding)
    he_s = he[order].reshape(-1)
    ws_s = ws[order].reshape(-1)
    we_s = we[order].reshape(-1)

    kernel = functools.partial(_roi_pool_kernel, roi_size)
    grid_spec = pltpu.PrefetchScalarGridSpec(
        num_scalar_prefetch=5,
        grid=(R,),
        in_specs=[
            pl.BlockSpec(
                (1, H, W, C),
                lambda r, bidx_r, hs_r, he_r, ws_r, we_r: (bidx_r[r], 0, 0, 0)),
        ],
        out_specs=pl.BlockSpec((1, roi_size * roi_size, C), lambda r, *_: (r, 0, 0)),
    )
    pooled_s = pl.pallas_call(
        kernel,
        out_shape=jax.ShapeDtypeStruct((R, roi_size * roi_size, C), jnp.float32),
        grid_spec=grid_spec,
        compiler_params=pltpu.CompilerParams(
            dimension_semantics=("parallel",),
            vmem_limit_bytes=32 * 1024 * 1024),
    )(bidx_s, hs_s, he_s, ws_s, we_s, x_nhwc)
    return pooled_s[inv]                              # back to original RoI order


# ---------------------------------------------------------------------------
# Kernel 2: tiled linear  y = x @ w.T + b  (torch layout w:(N, K)),
#   bf16 operands, f32 accumulation, optional fused ReLU.
#   grid = (M/tm, N/tn, K/tk), accumulator in VMEM scratch, pl.when init/final.
# ---------------------------------------------------------------------------
def _linear_kernel(apply_relu, x_ref, w_ref, b_ref, o_ref, acc_ref):
    k = pl.program_id(2)

    @pl.when(k == 0)
    def _():
        acc_ref[...] = jnp.zeros_like(acc_ref)

    # Contract the last dim of both operands (== x @ w.T, no weight transpose).
    acc_ref[...] += lax.dot_general(
        x_ref[...], w_ref[...],
        dimension_numbers=(((1,), (1,)), ((), ())),
        preferred_element_type=jnp.float32)

    @pl.when(k == pl.num_programs(2) - 1)
    def _():
        out = acc_ref[...] + b_ref[...]
        if apply_relu:
            out = jnp.maximum(out, 0.0)
        o_ref[...] = out.astype(o_ref.dtype)


def _round_up(v, m):
    return (v + m - 1) // m * m


def pallas_linear(x, w, b, relu=False):
    """x: (M, K), w: (N, K) torch layout, b: (N,).  Returns f32 (M, N)."""
    M, K = x.shape
    N = w.shape[0]
    tm = min(128, _round_up(M, 8))
    tn = min(256, _round_up(N, 128))
    tk = min(512, _round_up(K, 128))
    Mp, Np, Kp = _round_up(M, tm), _round_up(N, tn), _round_up(K, tk)

    xp = jnp.pad(x.astype(jnp.bfloat16), ((0, Mp - M), (0, Kp - K)))
    wp = jnp.pad(w.astype(jnp.bfloat16), ((0, Np - N), (0, Kp - K)))
    bp = jnp.pad(b.astype(jnp.float32), (0, Np - N)).reshape(1, Np)

    grid = (Mp // tm, Np // tn, Kp // tk)
    out = pl.pallas_call(
        functools.partial(_linear_kernel, relu),
        out_shape=jax.ShapeDtypeStruct((Mp, Np), jnp.float32),
        grid_spec=pltpu.PrefetchScalarGridSpec(
            num_scalar_prefetch=0,
            grid=grid,
            in_specs=[
                pl.BlockSpec((tm, tk), lambda i, j, k: (i, k)),
                pl.BlockSpec((tn, tk), lambda i, j, k: (j, k)),
                pl.BlockSpec((1, tn), lambda i, j, k: (0, j)),
            ],
            out_specs=pl.BlockSpec((tm, tn), lambda i, j, k: (i, j)),
            scratch_shapes=[pltpu.VMEM((tm, tn), jnp.float32)],
        ),
        compiler_params=pltpu.CompilerParams(
            dimension_semantics=("parallel", "parallel", "arbitrary"),
            vmem_limit_bytes=32 * 1024 * 1024),
    )(xp, wp, bp)
    return out[:M, :N]


# ---------------------------------------------------------------------------
# One-time ("model load") weight re-layout:
#   - fold torch's C-major pooled flatten into w1's column order (NHWC pooling)
#   - fuse cls_loc + score into one lane-padded output projection
#   - keep torch (out, in) layout; cast matmul weights to bf16
# ---------------------------------------------------------------------------
def prepare_head_params(params, n_channels, roi_size):
    hidden, d0 = params["w1"].shape
    k = roi_size * roi_size
    assert d0 == n_channels * k
    w1 = (params["w1"].reshape(hidden, n_channels, k)
          .transpose(0, 2, 1).reshape(hidden, d0))
    w_heads = jnp.concatenate([params["w_loc"], params["w_score"]], axis=0)
    b_heads = jnp.concatenate([params["b_loc"], params["b_score"]], axis=0)
    return {
        "w1": w1.astype(jnp.bfloat16), "b1": params["b1"].astype(jnp.float32),
        "w2": params["w2"].astype(jnp.bfloat16), "b2": params["b2"].astype(jnp.float32),
        "w_heads": w_heads.astype(jnp.bfloat16), "b_heads": b_heads.astype(jnp.float32),
        "n_loc": int(params["w_loc"].shape[0]),
    }


def fc_head(pool_flat, hp):
    h = pallas_linear(pool_flat, hp["w1"], hp["b1"], relu=True)
    fc7 = pallas_linear(h, hp["w2"], hp["b2"], relu=True)
    out = pallas_linear(fc7, hp["w_heads"], hp["b_heads"], relu=False)
    n_loc = hp["n_loc"]
    return out[:, :n_loc], out[:, n_loc:]


# ---------------------------------------------------------------------------
# Full forward: mirrors VGG16RoIHead.forward
# ---------------------------------------------------------------------------
def vgg16_roi_head_forward(x, rois, roi_indices, head_params, roi_size, spatial_scale):
    rois = rois.astype(jnp.float32)
    roi_indices = roi_indices.astype(jnp.float32)
    indices_and_rois = jnp.concatenate([roi_indices[:, None], rois], axis=1)
    # (idx, y1, x1, y2, x2) -> (idx, x1, y1, x2, y2)
    xy_indices_and_rois = indices_and_rois[:, jnp.array([0, 2, 1, 4, 3])]
    pooled = roi_pool(x, xy_indices_and_rois, roi_size, spatial_scale)  # (R, S*S, C)
    R = pooled.shape[0]
    pool_flat = pooled.reshape(R, -1)   # (R, S*S*C); matches permuted w1 columns
    roi_cls_locs, roi_scores = fc_head(pool_flat, head_params)
    return roi_cls_locs, roi_scores


if __name__ == "__main__":
    key = jax.random.PRNGKey(0)
    N, C, H, W = 2, 8, 16, 16          # feature map (NCHW)
    roi_size = 7
    spatial_scale = 0.5
    n_class = 4
    hidden = 64                         # stand-in for the 4096 VGG fc width
    R = 8                               # total number of RoIs

    keys = jax.random.split(key, 12)
    x = jax.random.normal(keys[0], (N, C, H, W), jnp.float32)

    img_h = H / spatial_scale
    img_w = W / spatial_scale
    # rois in (y_min, x_min, y_max, x_max), image coordinates (as the module expects)
    ymin = jax.random.uniform(keys[1], (R,), minval=0.0, maxval=img_h * 0.5)
    xmin = jax.random.uniform(keys[2], (R,), minval=0.0, maxval=img_w * 0.5)
    ymax = ymin + jax.random.uniform(keys[3], (R,), minval=4.0, maxval=img_h * 0.5)
    xmax = xmin + jax.random.uniform(keys[4], (R,), minval=4.0, maxval=img_w * 0.5)
    rois = jnp.stack([ymin, xmin, ymax, xmax], axis=1)
    roi_indices = jax.random.randint(keys[5], (R,), 0, N)

    # Deterministic parameter init in torch layout (out, in); cls_loc ~ N(0,0.001),
    # score ~ N(0,0.01), biases zero — matching the module's __init__.
    D0 = C * roi_size * roi_size
    params = {
        "w1": jax.random.normal(keys[6], (hidden, D0), jnp.float32) * 0.01,
        "b1": jnp.zeros((hidden,), jnp.float32),
        "w2": jax.random.normal(keys[7], (hidden, hidden), jnp.float32) * 0.01,
        "b2": jnp.zeros((hidden,), jnp.float32),
        "w_loc": jax.random.normal(keys[8], (n_class * 4, hidden), jnp.float32) * 0.001,
        "b_loc": jnp.zeros((n_class * 4,), jnp.float32),
        "w_score": jax.random.normal(keys[9], (n_class, hidden), jnp.float32) * 0.01,
        "b_score": jnp.zeros((n_class,), jnp.float32),
    }
    head_params = prepare_head_params(params, C, roi_size)

    roi_cls_locs, roi_scores = vgg16_roi_head_forward(
        x, rois, roi_indices, head_params, roi_size, spatial_scale)
    jax.block_until_ready((roi_cls_locs, roi_scores))

    assert roi_cls_locs.shape == (R, n_class * 4)
    assert roi_scores.shape == (R, n_class)
    assert bool(jnp.all(jnp.isfinite(roi_cls_locs))) and bool(jnp.all(jnp.isfinite(roi_scores)))
    print("KERNEL_OK")
</pallas_src>

<mosaic_0001>
module attributes {stable_mosaic.version = 11 : i64} {
  func.func @_roi_pool_kernel(%arg0: i32, %arg1: memref<8xi32, #tpu.memory_space<smem>>, %arg2: memref<56xi32, #tpu.memory_space<smem>>, %arg3: memref<56xi32, #tpu.memory_space<smem>>, %arg4: memref<56xi32, #tpu.memory_space<smem>>, %arg5: memref<56xi32, #tpu.memory_space<smem>>, %arg6: memref<1x16x16x8xf32, #tpu.memory_space<vmem>>, %arg7: memref<1x49x8xf32, #tpu.memory_space<vmem>>) attributes {dimension_semantics = [#tpu.dimension_semantics<parallel>], iteration_bounds = array<i64: 8>, scalar_prefetch = 5 : i64, scratch_operands = 0 : i64, tpu.core_type = #tpu.core_type<tc>, window_params = [{transform_indices = @transform_0, window_bounds = array<i64: 1, 16, 16, 8>}, {transform_indices = @transform_1, window_bounds = array<i64: 1, 49, 8>}]} {
    %c0 = arith.constant 0 : index
    %c0_0 = arith.constant 0 : index
    %c0_1 = arith.constant 0 : index
    %c0_2 = arith.constant 0 : index
    %0 = vector.load %arg6[%c0, %c0_0, %c0_1, %c0_2] : memref<1x16x16x8xf32, #tpu.memory_space<vmem>>, vector<1x16x16x8xf32>
    %1 = vector.shape_cast %0 : vector<1x16x16x8xf32> to vector<16x16x8xf32>
    %2 = tpu.iota {dimensions = array<i32: 0>} : vector<16x1xi32>
    %3 = tpu.iota {dimensions = array<i32: 0>} : vector<16x1xi32>
    %c7_i32 = arith.constant 7 : i32
    %4 = arith.muli %arg0, %c7_i32 : i32
    %c0_i32 = arith.constant 0 : i32
    %5 = arith.addi %4, %c0_i32 : i32
    %6 = arith.index_cast %5 : i32 to index
    %7 = memref.load %arg4[%6] : memref<56xi32, #tpu.memory_space<smem>>
    %c7_i32_3 = arith.constant 7 : i32
    %8 = arith.muli %arg0, %c7_i32_3 : i32
    %c0_i32_4 = arith.constant 0 : i32
    %9 = arith.addi %8, %c0_i32_4 : i32
    %10 = arith.index_cast %9 : i32 to index
    %11 = memref.load %arg5[%10] : memref<56xi32, #tpu.memory_space<smem>>
    %12 = vector.broadcast %7 : i32 to vector<16x1xi32>
    %13 = arith.cmpi sge, %2, %12 : vector<16x1xi32>
    %14 = vector.broadcast %11 : i32 to vector<16x1xi32>
    %15 = arith.cmpi slt, %2, %14 : vector<16x1xi32>
    %16 = arith.andi %13, %15 : vector<16x1xi1>
    %17 = vector.shape_cast %16 : vector<16x1xi1> to vector<1x16x1xi1>
    %cst = arith.constant -3.40282347E+38 : f32
    %18 = vector.shape_cast %17 : vector<1x16x1xi1> to vector<1x16x1xi1>
    %19 = vector.broadcast %18 : vector<1x16x1xi1> to vector<16x16x8xi1>
    %20 = vector.broadcast %cst : f32 to vector<16x16x8xf32>
    %21 = arith.select %19, %1, %20 : vector<16x16x8xi1>, vector<16x16x8xf32>
    %cst_5 = arith.constant dense<0xFF800000> : vector<16x8xf32>
    %22 = vector.multi_reduction <maximumf>, %21, %cst_5 [1] : vector<16x16x8xf32> to vector<16x8xf32>
    %c7_i32_6 = arith.constant 7 : i32
    %23 = arith.muli %arg0, %c7_i32_6 : i32
    %c1_i32 = arith.constant 1 : i32
    %24 = arith.addi %23, %c1_i32 : i32
    %25 = arith.index_cast %24 : i32 to index
    %26 = memref.load %arg4[%25] : memref<56xi32, #tpu.memory_space<smem>>
    %c7_i32_7 = arith.constant 7 : i32
    %27 = arith.muli %arg0, %c7_i32_7 : i32
    %c1_i32_8 = arith.constant 1 : i32
    %28 = arith.addi %27, %c1_i32_8 : i32
    %29 = arith.index_cast %28 : i32 to index
    %30 = memref.load %arg5[%29] : memref<56xi32, #tpu.memory_space<smem>>
    %31 = vector.broadcast %26 : i32 to vector<16x1xi32>
    %32 = arith.cmpi sge, %2, %31 : vector<16x1xi32>
    %33 = vector.broadcast %30 : i32 to vector<16x1xi32>
    %34 = arith.cmpi slt, %2, %33 : vector<16x1xi32>
    %35 = arith.andi %32, %34 : vector<16x1xi1>
    %36 = vector.shape_cast %35 : vector<16x1xi1> to vector<1x16x1xi1>
    %cst_9 = arith.constant -3.40282347E+38 : f32
    %37 = vector.shape_cast %36 : vector<1x16x1xi1> to vector<1x16x1xi1>
    %38 = vector.broadcast %37 : vector<1x16x1xi1> to vector<16x16x8xi1>
    %39 = vector.broadcast %cst_9 : f32 to vector<16x16x8xf32>
    %40 = arith.select %38, %1, %39 : vector<16x16x8xi1>, vector<16x16x8xf32>
    %cst_10 = arith.constant dense<0xFF800000> : vector<16x8xf32>
    %41 = vector.multi_reduction <maximumf>, %40, %cst_10 [1] : vector<16x16x8xf32> to vector<16x8xf32>
    %c7_i32_11 = arith.constant 7 : i32
    %42 = arith.muli %arg0, %c7_i32_11 : i32
    %c2_i32 = arith.constant 2 : i32
    %43 = arith.addi %42, %c2_i32 : i32
    %44 = arith.index_cast %43 : i32 to index
    %45 = memref.load %arg4[%44] : memref<56xi32, #tpu.memory_space<smem>>
    %c7_i32_12 = arith.constant 7 : i32
    %46 = arith.muli %arg0, %c7_i32_12 : i32
    %c2_i32_13 = arith.constant 2 : i32
    %47 = arith.addi %46, %c2_i32_13 : i32
    %48 = arith.index_cast %47 : i32 to index
    %49 = memref.load %arg5[%48] : memref<56xi32, #tpu.memory_space<smem>>
    %50 = vector.broadcast %45 : i32 to vector<16x1xi32>
    %51 = arith.cmpi sge, %2, %50 : vector<16x1xi32>
    %52 = vector.broadcast %49 : i32 to vector<16x1xi32>
    %53 = arith.cmpi slt, %2, %52 : vector<16x1xi32>
    %54 = arith.andi %51, %53 : vector<16x1xi1>
    %55 = vector.shape_cast %54 : vector<16x1xi1> to vector<1x16x1xi1>
    %cst_14 = arith.constant -3.40282347E+38 : f32
    %56 = vector.shape_cast %55 : vector<1x16x1xi1> to vector<1x16x1xi1>
    %57 = vector.broadcast %56 : vector<1x16x1xi1> to vector<16x16x8xi1>
    %58 = vector.broadcast %cst_14 : f32 to vector<16x16x8xf32>
    %59 = arith.select %57, %1, %58 : vector<16x16x8xi1>, vector<16x16x8xf32>
    %cst_15 = arith.constant dense<0xFF800000> : vector<16x8xf32>
    %60 = vector.multi_reduction <maximumf>, %59, %cst_15 [1] : vector<16x16x8xf32> to vector<16x8xf32>
    %c7_i32_16 = arith.constant 7 : i32
    %61 = arith.muli %arg0, %c7_i32_16 : i32
    %c3_i32 = arith.constant 3 : i32
    %62 = arith.addi %61, %c3_i32 : i32
    %63 = arith.index_cast %62 : i32 to index
    %64 = memref.load %arg4[%63] : memref<56xi32, #tpu.memory_space<smem>>
    %c7_i32_17 = arith.constant 7 : i32
    %65 = arith.muli %arg0, %c7_i32_17 : i32
    %c3_i32_18 = arith.constant 3 : i32
    %66 = arith.addi %65, %c3_i32_18 : i32
    %67 = arith.index_cast %66 : i32 to index
    %68 = memref.load %arg5[%67] : memref<56xi32, #tpu.memory_space<smem>>
    %69 = vector.broadcast %64 : i32 to vector<16x1xi32>
    %70 = arith.cmpi sge, %2, %69 : vector<16x1xi32>
    %71 = vector.broadcast %68 : i32 to vector<16x1xi32>
    %72 = arith.cmpi slt, %2, %71 : vector<16x1xi32>
    %73 = arith.andi %70, %72 : vector<16x1xi1>
    %74 = vector.shape_cast %73 : vector<16x1xi1> to vector<1x16x1xi1>
    %cst_19 = arith.constant -3.40282347E+38 : f32
    %75 = vector.shape_cast %74 : vector<1x16x1xi1> to vector<1x16x1xi1>
    %76 = vector.broadcast %75 : vector<1x16x1xi1> to vector<16x16x8xi1>
    %77 = vector.broadcast %cst_19 : f32 to vector<16x16x8xf32>
    %78 = arith.select %76, %1, %77 : vector<16x16x8xi1>, vector<16x16x8xf32>
    %cst_20 = arith.constant dense<0xFF800000> : vector<16x8xf32>
    %79 = vector.multi_reduction <maximumf>, %78, %cst_20 [1] : vector<16x16x8xf32> to vector<16x8xf32>
    %c7_i32_21 = arith.constant 7 : i32
    %80 = arith.muli %arg0, %c7_i32_21 : i32
    %c4_i32 = arith.constant 4 : i32
    %81 = arith.addi %80, %c4_i32 : i32
    %82 = arith.index_cast %81 : i32 to index
    %83 = memref.load %arg4[%82] : memref<56xi32, #tpu.memory_space<smem>>
    %c7_i32_22 = arith.constant 7 : i32
    %84 = arith.muli %arg0, %c7_i32_22 : i32
    %c4_i32_23 = arith.constant 4 : i32
    %85 = arith.addi %84, %c4_i32_23 : i32
    %86 = arith.index_cast %85 : i32 to index
    %87 = memref.load %arg5[%86] : memref<56xi32, #tpu.memory_space<smem>>
    %88 = vector.broadcast %83 : i32 to vector<16x1xi32>
    %89 = arith.cmpi sge, %2, %88 : vector<16x1xi32>
    %90 = vector.broadcast %87 : i32 to vector<16x1xi32>
    %91 = arith.cmpi slt, %2, %90 : vector<16x1xi32>
    %92 = arith.andi %89, %91 : vector<16x1xi1>
    %93 = vector.shape_cast %92 : vector<16x1xi1> to vector<1x16x1xi1>
    %cst_24 = arith.constant -3.40282347E+38 : f32
    %94 = vector.shape_cast %93 : vector<1x16x1xi1> to vector<1x16x1xi1>
    %95 = vector.broadcast %94 : vector<1x16x1xi1> to vector<16x16x8xi1>
    %96 = vector.broadcast %cst_24 : f32 to vector<16x16x8xf32>
    %97 = arith.select %95, %1, %96 : vector<16x16x8xi1>, vector<16x16x8xf32>
    %cst_25 = arith.constant dense<0xFF800000> : vector<16x8xf32>
    %98 = vector.multi_reduction <maximumf>, %97, %cst_25 [1] : vector<16x16x8xf32> to vector<16x8xf32>
    %c7_i32_26 = arith.constant 7 : i32
    %99 = arith.muli %arg0, %c7_i32_26 : i32
    %c5_i32 = arith.constant 5 : i32
    %100 = arith.addi %99, %c5_i32 : i32
    %101 = arith.index_cast %100 : i32 to index
    %102 = memref.load %arg4[%101] : memref<56xi32, #tpu.memory_space<smem>>
    %c7_i32_27 = arith.constant 7 : i32
    %103 = arith.muli %arg0, %c7_i32_27 : i32
    %c5_i32_28 = arith.constant 5 : i32
    %104 = arith.addi %103, %c5_i32_28 : i32
    %105 = arith.index_cast %104 : i32 to index
    %106 = memref.load %arg5[%105] : memref<56xi32, #tpu.memory_space<smem>>
    %107 = vector.broadcast %102 : i32 to vector<16x1xi32>
    %108 = arith.cmpi sge, %2, %107 : vector<16x1xi32>
    %109 = vector.broadcast %106 : i32 to vector<16x1xi32>
    %110 = arith.cmpi slt, %2, %109 : vector<16x1xi32>
    %111 = arith.andi %108, %110 : vector<16x1xi1>
    %112 = vector.shape_cast %111 : vector<16x1xi1> to vector<1x16x1xi1>
    %cst_29 = arith.constant -3.40282347E+38 : f32
    %113 = vector.shape_cast %112 : vector<1x16x1xi1> to vector<1x16x1xi1>
    %114 = vector.broadcast %113 : vector<1x16x1xi1> to vector<16x16x8xi1>
    %115 = vector.broadcast %cst_29 : f32 to vector<16x16x8xf32>
    %116 = arith.select %114, %1, %115 : vector<16x16x8xi1>, vector<16x16x8xf32>
    %cst_30 = arith.constant dense<0xFF800000> : vector<16x8xf32>
    %117 = vector.multi_reduction <maximumf>, %116, %cst_30 [1] : vector<16x16x8xf32> to vector<16x8xf32>
    %c7_i32_31 = arith.constant 7 : i32
    %118 = arith.muli %arg0, %c7_i32_31 : i32
    %c6_i32 = arith.constant 6 : i32
    %119 = arith.addi %118, %c6_i32 : i32
    %120 = arith.index_cast %119 : i32 to index
    %121 = memref.load %arg4[%120] : memref<56xi32, #tpu.memory_space<smem>>
    %c7_i32_32 = arith.constant 7 : i32
    %122 = arith.muli %arg0, %c7_i32_32 : i32
    %c6_i32_33 = arith.constant 6 : i32
    %123 = arith.addi %122, %c6_i32_33 : i32
    %124 = arith.index_cast %123 : i32 to index
    %125 = memref.load %arg5[%124] : memref<56xi32, #tpu.memory_space<smem>>
    %126 = vector.broadcast %121 : i32 to vector<16x1xi32>
    %127 = arith.cmpi sge, %2, %126 : vector<16x1xi32>
    %128 = vector.broadcast %125 : i32 to vector<16x1xi32>
    %129 = arith.cmpi slt, %2, %128 : vector<16x1xi32>
    %130 = arith.andi %127, %129 : vector<16x1xi1>
    %131 = vector.shape_cast %130 : vector<16x1xi1> to vector<1x16x1xi1>
    %cst_34 = arith.constant -3.40282347E+38 : f32
    %132 = vector.shape_cast %131 : vector<1x16x1xi1> to vector<1x16x1xi1>
    %133 = vector.broadcast %132 : vector<1x16x1xi1> to vector<16x16x8xi1>
    %134 = vector.broadcast %cst_34 : f32 to vector<16x16x8xf32>
    %135 = arith.select %133, %1, %134 : vector<16x16x8xi1>, vector<16x16x8xf32>
    %cst_35 = arith.constant dense<0xFF800000> : vector<16x8xf32>
    %136 = vector.multi_reduction <maximumf>, %135, %cst_35 [1] : vector<16x16x8xf32> to vector<16x8xf32>
    %137 = vector.shape_cast %22 : vector<16x8xf32> to vector<1x16x8xf32>
    %138 = vector.shape_cast %41 : vector<16x8xf32> to vector<1x16x8xf32>
    %139 = vector.shape_cast %60 : vector<16x8xf32> to vector<1x16x8xf32>
    %140 = vector.shape_cast %79 : vector<16x8xf32> to vector<1x16x8xf32>
    %141 = vector.shape_cast %98 : vector<16x8xf32> to vector<1x16x8xf32>
    %142 = vector.shape_cast %117 : vector<16x8xf32> to vector<1x16x8xf32>
    %143 = vector.shape_cast %136 : vector<16x8xf32> to vector<1x16x8xf32>
    %144 = tpu.concatenate %137, %138, %139, %140, %141, %142, %143 in 0 : vector<1x16x8xf32>, vector<1x16x8xf32>, vector<1x16x8xf32>, vector<1x16x8xf32>, vector<1x16x8xf32>, vector<1x16x8xf32>, vector<1x16x8xf32> -> vector<7x16x8xf32>
    %c7_i32_36 = arith.constant 7 : i32
    %145 = arith.muli %arg0, %c7_i32_36 : i32
    %c0_i32_37 = arith.constant 0 : i32
    %146 = arith.addi %145, %c0_i32_37 : i32
    %147 = arith.index_cast %146 : i32 to index
    %148 = memref.load %arg2[%147] : memref<56xi32, #tpu.memory_space<smem>>
    %c7_i32_38 = arith.constant 7 : i32
    %149 = arith.muli %arg0, %c7_i32_38 : i32
    %c0_i32_39 = arith.constant 0 : i32
    %150 = arith.addi %149, %c0_i32_39 : i32
    %151 = arith.index_cast %150 : i32 to index
    %152 = memref.load %arg3[%151] : memref<56xi32, #tpu.memory_space<smem>>
    %153 = vector.broadcast %148 : i32 to vector<16x1xi32>
    %154 = arith.cmpi sge, %3, %153 : vector<16x1xi32>
    %155 = vector.broadcast %152 : i32 to vector<16x1xi32>
    %156 = arith.cmpi slt, %3, %155 : vector<16x1xi32>
    %157 = arith.andi %154, %156 : vector<16x1xi1>
    %158 = vector.shape_cast %157 : vector<16x1xi1> to vector<1x16x1xi1>
    %cst_40 = arith.constant -3.40282347E+38 : f32
    %159 = vector.shape_cast %158 : vector<1x16x1xi1> to vector<1x16x1xi1>
    %160 = vector.broadcast %159 : vector<1x16x1xi1> to vector<7x16x8xi1>
    %161 = vector.broadcast %cst_40 : f32 to vector<7x16x8xf32>
    %162 = arith.select %160, %144, %161 : vector<7x16x8xi1>, vector<7x16x8xf32>
    %cst_41 = arith.constant dense<0xFF800000> : vector<7x8xf32>
    %163 = vector.multi_reduction <maximumf>, %162, %cst_41 [1] : vector<7x16x8xf32> to vector<7x8xf32>
    %cst_42 = arith.constant -3.40282347E+38 : f32
    %164 = vector.broadcast %cst_42 : f32 to vector<7x8xf32>
    %165 = arith.cmpf ogt, %163, %164 : vector<7x8xf32>
    %cst_43 = arith.constant 0.000000e+00 : f32
    %166 = vector.broadcast %cst_43 : f32 to vector<7x8xf32>
    %167 = arith.select %165, %163, %166 : vector<7x8xi1>, vector<7x8xf32>
    %c0_44 = arith.constant 0 : index
    %c0_45 = arith.constant 0 : index
    %c0_46 = arith.constant 0 : index
    %168 = vector.load %arg7[%c0_44, %c0_45, %c0_46] : memref<1x49x8xf32, #tpu.memory_space<vmem>>, vector<1x7x8xf32>
    %169 = vector.shape_cast %168 : vector<1x7x8xf32> to vector<7x8xf32>
    %170 = vector.shape_cast %167 : vector<7x8xf32> to vector<1x7x8xf32>
    tpu.vector_store %arg7[%c0_44, %c0_45, %c0_46], %170 {strides = array<i32>} : memref<1x49x8xf32, #tpu.memory_space<vmem>>, vector<1x7x8xf32>,
    %c7_i32_47 = arith.constant 7 : i32
    %171 = arith.muli %arg0, %c7_i32_47 : i32
    %c1_i32_48 = arith.constant 1 : i32
    %172 = arith.addi %171, %c1_i32_48 : i32
    %173 = arith.index_cast %172 : i32 to index
    %174 = memref.load %arg2[%173] : memref<56xi32, #tpu.memory_space<smem>>
    %c7_i32_49 = arith.constant 7 : i32
    %175 = arith.muli %arg0, %c7_i32_49 : i32
    %c1_i32_50 = arith.constant 1 : i32
    %176 = arith.addi %175, %c1_i32_50 : i32
    %177 = arith.index_cast %176 : i32 to index
    %178 = memref.load %arg3[%177] : memref<56xi32, #tpu.memory_space<smem>>
    %179 = vector.broadcast %174 : i32 to vector<16x1xi32>
    %180 = arith.cmpi sge, %3, %179 : vector<16x1xi32>
    %181 = vector.broadcast %178 : i32 to vector<16x1xi32>
    %182 = arith.cmpi slt, %3, %181 : vector<16x1xi32>
    %183 = arith.andi %180, %182 : vector<16x1xi1>
    %184 = vector.shape_cast %183 : vector<16x1xi1> to vector<1x16x1xi1>
    %cst_51 = arith.constant -3.40282347E+38 : f32
    %185 = vector.shape_cast %184 : vector<1x16x1xi1> to vector<1x16x1xi1>
    %186 = vector.broadcast %185 : vector<1x16x1xi1> to vector<7x16x8xi1>
    %187 = vector.broadcast %cst_51 : f32 to vector<7x16x8xf32>
    %188 = arith.select %186, %144, %187 : vector<7x16x8xi1>, vector<7x16x8xf32>
    %cst_52 = arith.constant dense<0xFF800000> : vector<7x8xf32>
    %189 = vector.multi_reduction <maximumf>, %188, %cst_52 [1] : vector<7x16x8xf32> to vector<7x8xf32>
    %cst_53 = arith.constant -3.40282347E+38 : f32
    %190 = vector.broadcast %cst_53 : f32 to vector<7x8xf32>
    %191 = arith.cmpf ogt, %189, %190 : vector<7x8xf32>
    %cst_54 = arith.constant 0.000000e+00 : f32
    %192 = vector.broadcast %cst_54 : f32 to vector<7x8xf32>
    %193 = arith.select %191, %189, %192 : vector<7x8xi1>, vector<7x8xf32>
    %c0_55 = arith.constant 0 : index
    %c7 = arith.constant 7 : index
    %c0_56 = arith.constant 0 : index
    %194 = vector.load %arg7[%c0_55, %c7, %c0_56] : memref<1x49x8xf32, #tpu.memory_space<vmem>>, vector<1x7x8xf32>
    %195 = vector.shape_cast %194 : vector<1x7x8xf32> to vector<7x8xf32>
    %196 = vector.shape_cast %193 : vector<7x8xf32> to vector<1x7x8xf32>
    tpu.vector_store %arg7[%c0_55, %c7, %c0_56], %196 {strides = array<i32>} : memref<1x49x8xf32, #tpu.memory_space<vmem>>, vector<1x7x8xf32>,
    %c7_i32_57 = arith.constant 7 : i32
    %197 = arith.muli %arg0, %c7_i32_57 : i32
    %c2_i32_58 = arith.constant 2 : i32
    %198 = arith.addi %197, %c2_i32_58 : i32
    %199 = arith.index_cast %198 : i32 to index
    %200 = memref.load %arg2[%199] : memref<56xi32, #tpu.memory_space<smem>>
    %c7_i32_59 = arith.constant 7 : i32
    %201 = arith.muli %arg0, %c7_i32_59 : i32
    %c2_i32_60 = arith.constant 2 : i32
    %202 = arith.addi %201, %c2_i32_60 : i32
    %203 = arith.index_cast %202 : i32 to index
    %204 = memref.load %arg3[%203] : memref<56xi32, #tpu.memory_space<smem>>
    %205 = vector.broadcast %200 : i32 to vector<16x1xi32>
    %206 = arith.cmpi sge, %3, %205 : vector<16x1xi32>
    %207 = vector.broadcast %204 : i32 to vector<16x1xi32>
    %208 = arith.cmpi slt, %3, %207 : vector<16x1xi32>
    %209 = arith.andi %206, %208 : vector<16x1xi1>
    %210 = vector.shape_cast %209 : vector<16x1xi1> to vector<1x16x1xi1>
    %cst_61 = arith.constant -3.40282347E+38 : f32
    %211 = vector.shape_cast %210 : vector<1x16x1xi1> to vector<1x16x1xi1>
    %212 = vector.broadcast %211 : vector<1x16x1xi1> to vector<7x16x8xi1>
    %213 = vector.broadcast %cst_61 : f32 to vector<7x16x8xf32>
    %214 = arith.select %212, %144, %213 : vector<7x16x8xi1>, vector<7x16x8xf32>
    %cst_62 = arith.constant dense<0xFF800000> : vector<7x8xf32>
    %215 = vector.multi_reduction <maximumf>, %214, %cst_62 [1] : vector<7x16x8xf32> to vector<7x8xf32>
    %cst_63 = arith.constant -3.40282347E+38 : f32
    %216 = vector.broadcast %cst_63 : f32 to vector<7x8xf32>
    %217 = arith.cmpf ogt, %215, %216 : vector<7x8xf32>
    %cst_64 = arith.constant 0.000000e+00 : f32
    %218 = vector.broadcast %cst_64 : f32 to vector<7x8xf32>
    %219 = arith.select %217, %215, %218 : vector<7x8xi1>, vector<7x8xf32>
    %c0_65 = arith.constant 0 : index
    %c14 = arith.constant 14 : index
    %c0_66 = arith.constant 0 : index
    %220 = vector.load %arg7[%c0_65, %c14, %c0_66] : memref<1x49x8xf32, #tpu.memory_space<vmem>>, vector<1x7x8xf32>
    %221 = vector.shape_cast %220 : vector<1x7x8xf32> to vector<7x8xf32>
    %222 = vector.shape_cast %219 : vector<7x8xf32> to vector<1x7x8xf32>
    tpu.vector_store %arg7[%c0_65, %c14, %c0_66], %222 {strides = array<i32>} : memref<1x49x8xf32, #tpu.memory_space<vmem>>, vector<1x7x8xf32>,
    %c7_i32_67 = arith.constant 7 : i32
    %223 = arith.muli %arg0, %c7_i32_67 : i32
    %c3_i32_68 = arith.constant 3 : i32
    %224 = arith.addi %223, %c3_i32_68 : i32
    %225 = arith.index_cast %224 : i32 to index
    %226 = memref.load %arg2[%225] : memref<56xi32, #tpu.memory_space<smem>>
    %c7_i32_69 = arith.constant 7 : i32
    %227 = arith.muli %arg0, %c7_i32_69 : i32
    %c3_i32_70 = arith.constant 3 : i32
    %228 = arith.addi %227, %c3_i32_70 : i32
    %229 = arith.index_cast %228 : i32 to index
    %230 = memref.load %arg3[%229] : memref<56xi32, #tpu.memory_space<smem>>
    %231 = vector.broadcast %226 : i32 to vector<16x1xi32>
    %232 = arith.cmpi sge, %3, %231 : vector<16x1xi32>
    %233 = vector.broadcast %230 : i32 to vector<16x1xi32>
    %234 = arith.cmpi slt, %3, %233 : vector<16x1xi32>
    %235 = arith.andi %232, %234 : vector<16x1xi1>
    %236 = vector.shape_cast %235 : vector<16x1xi1> to vector<1x16x1xi1>
    %cst_71 = arith.constant -3.40282347E+38 : f32
    %237 = vector.shape_cast %236 : vector<1x16x1xi1> to vector<1x16x1xi1>
    %238 = vector.broadcast %237 : vector<1x16x1xi1> to vector<7x16x8xi1>
    %239 = vector.broadcast %cst_71 : f32 to vector<7x16x8xf32>
    %240 = arith.select %238, %144, %239 : vector<7x16x8xi1>, vector<7x16x8xf32>
    %cst_72 = arith.constant dense<0xFF800000> : vector<7x8xf32>
    %241 = vector.multi_reduction <maximumf>, %240, %cst_72 [1] : vector<7x16x8xf32> to vector<7x8xf32>
    %cst_73 = arith.constant -3.40282347E+38 : f32
    %242 = vector.broadcast %cst_73 : f32 to vector<7x8xf32>
    %243 = arith.cmpf ogt, %241, %242 : vector<7x8xf32>
    %cst_74 = arith.constant 0.000000e+00 : f32
    %244 = vector.broadcast %cst_74 : f32 to vector<7x8xf32>
    %245 = arith.select %243, %241, %244 : vector<7x8xi1>, vector<7x8xf32>
    %c0_75 = arith.constant 0 : index
    %c21 = arith.constant 21 : index
    %c0_76 = arith.constant 0 : index
    %246 = vector.load %arg7[%c0_75, %c21, %c0_76] : memref<1x49x8xf32, #tpu.memory_space<vmem>>, vector<1x7x8xf32>
    %247 = vector.shape_cast %246 : vector<1x7x8xf32> to vector<7x8xf32>
    %248 = vector.shape_cast %245 : vector<7x8xf32> to vector<1x7x8xf32>
    tpu.vector_store %arg7[%c0_75, %c21, %c0_76], %248 {strides = array<i32>} : memref<1x49x8xf32, #tpu.memory_space<vmem>>, vector<1x7x8xf32>,
    %c7_i32_77 = arith.constant 7 : i32
    %249 = arith.muli %arg0, %c7_i32_77 : i32
    %c4_i32_78 = arith.constant 4 : i32
    %250 = arith.addi %249, %c4_i32_78 : i32
    %251 = arith.index_cast %250 : i32 to index
    %252 = memref.load %arg2[%251] : memref<56xi32, #tpu.memory_space<smem>>
    %c7_i32_79 = arith.constant 7 : i32
    %253 = arith.muli %arg0, %c7_i32_79 : i32
    %c4_i32_80 = arith.constant 4 : i32
    %254 = arith.addi %253, %c4_i32_80 : i32
    %255 = arith.index_cast %254 : i32 to index
    %256 = memref.load %arg3[%255] : memref<56xi32, #tpu.memory_space<smem>>
    %257 = vector.broadcast %252 : i32 to vector<16x1xi32>
    %258 = arith.cmpi sge, %3, %257 : vector<16x1xi32>
    %259 = vector.broadcast %256 : i32 to vector<16x1xi32>
    %260 = arith.cmpi slt, %3, %259 : vector<16x1xi32>
    %261 = arith.andi %258, %260 : vector<16x1xi1>
    %262 = vector.shape_cast %261 : vector<16x1xi1> to vector<1x16x1xi1>
    %cst_81 = arith.constant -3.40282347E+38 : f32
    %263 = vector.shape_cast %262 : vector<1x16x1xi1> to vector<1x16x1xi1>
    %264 = vector.broadcast %263 : vector<1x16x1xi1> to vector<7x16x8xi1>
    %265 = vector.broadcast %cst_81 : f32 to vector<7x16x8xf32>
    %266 = arith.select %264, %144, %265 : vector<7x16x8xi1>, vector<7x16x8xf32>
    %cst_82 = arith.constant dense<0xFF800000> : vector<7x8xf32>
    %267 = vector.multi_reduction <maximumf>, %266, %cst_82 [1] : vector<7x16x8xf32> to vector<7x8xf32>
    %cst_83 = arith.constant -3.40282347E+38 : f32
    %268 = vector.broadcast %cst_83 : f32 to vector<7x8xf32>
    %269 = arith.cmpf ogt, %267, %268 : vector<7x8xf32>
    %cst_84 = arith.constant 0.000000e+00 : f32
    %270 = vector.broadcast %cst_84 : f32 to vector<7x8xf32>
    %271 = arith.select %269, %267, %270 : vector<7x8xi1>, vector<7x8xf32>
    %c0_85 = arith.constant 0 : index
    %c28 = arith.constant 28 : index
    %c0_86 = arith.constant 0 : index
    %272 = vector.load %arg7[%c0_85, %c28, %c0_86] : memref<1x49x8xf32, #tpu.memory_space<vmem>>, vector<1x7x8xf32>
    %273 = vector.shape_cast %272 : vector<1x7x8xf32> to vector<7x8xf32>
    %274 = vector.shape_cast %271 : vector<7x8xf32> to vector<1x7x8xf32>
    tpu.vector_store %arg7[%c0_85, %c28, %c0_86], %274 {strides = array<i32>} : memref<1x49x8xf32, #tpu.memory_space<vmem>>, vector<1x7x8xf32>,
    %c7_i32_87 = arith.constant 7 : i32
    %275 = arith.muli %arg0, %c7_i32_87 : i32
    %c5_i32_88 = arith.constant 5 : i32
    %276 = arith.addi %275, %c5_i32_88 : i32
    %277 = arith.index_cast %276 : i32 to index
    %278 = memref.load %arg2[%277] : memref<56xi32, #tpu.memory_space<smem>>
    %c7_i32_89 = arith.constant 7 : i32
    %279 = arith.muli %arg0, %c7_i32_89 : i32
    %c5_i32_90 = arith.constant 5 : i32
    %280 = arith.addi %279, %c5_i32_90 : i32
    %281 = arith.index_cast %280 : i32 to index
    %282 = memref.load %arg3[%281] : memref<56xi32, #tpu.memory_space<smem>>
    %283 = vector.broadcast %278 : i32 to vector<16x1xi32>
    %284 = arith.cmpi sge, %3, %283 : vector<16x1xi32>
    %285 = vector.broadcast %282 : i32 to vector<16x1xi32>
    %286 = arith.cmpi slt, %3, %285 : vector<16x1xi32>
    %287 = arith.andi %284, %286 : vector<16x1xi1>
    %288 = vector.shape_cast %287 : vector<16x1xi1> to vector<1x16x1xi1>
    %cst_91 = arith.constant -3.40282347E+38 : f32
    %289 = vector.shape_cast %288 : vector<1x16x1xi1> to vector<1x16x1xi1>
    %290 = vector.broadcast %289 : vector<1x16x1xi1> to vector<7x16x8xi1>
    %291 = vector.broadcast %cst_91 : f32 to vector<7x16x8xf32>
    %292 = arith.select %290, %144, %291 : vector<7x16x8xi1>, vector<7x16x8xf32>
    %cst_92 = arith.constant dense<0xFF800000> : vector<7x8xf32>
    %293 = vector.multi_reduction <maximumf>, %292, %cst_92 [1] : vector<7x16x8xf32> to vector<7x8xf32>
    %cst_93 = arith.constant -3.40282347E+38 : f32
    %294 = vector.broadcast %cst_93 : f32 to vector<7x8xf32>
    %295 = arith.cmpf ogt, %293, %294 : vector<7x8xf32>
    %cst_94 = arith.constant 0.000000e+00 : f32
    %296 = vector.broadcast %cst_94 : f32 to vector<7x8xf32>
    %297 = arith.select %295, %293, %296 : vector<7x8xi1>, vector<7x8xf32>
    %c0_95 = arith.constant 0 : index
    %c35 = arith.constant 35 : index
    %c0_96 = arith.constant 0 : index
    %298 = vector.load %arg7[%c0_95, %c35, %c0_96] : memref<1x49x8xf32, #tpu.memory_space<vmem>>, vector<1x7x8xf32>
    %299 = vector.shape_cast %298 : vector<1x7x8xf32> to vector<7x8xf32>
    %300 = vector.shape_cast %297 : vector<7x8xf32> to vector<1x7x8xf32>
    tpu.vector_store %arg7[%c0_95, %c35, %c0_96], %300 {strides = array<i32>} : memref<1x49x8xf32, #tpu.memory_space<vmem>>, vector<1x7x8xf32>,
    %c7_i32_97 = arith.constant 7 : i32
    %301 = arith.muli %arg0, %c7_i32_97 : i32
    %c6_i32_98 = arith.constant 6 : i32
    %302 = arith.addi %301, %c6_i32_98 : i32
    %303 = arith.index_cast %302 : i32 to index
    %304 = memref.load %arg2[%303] : memref<56xi32, #tpu.memory_space<smem>>
    %c7_i32_99 = arith.constant 7 : i32
    %305 = arith.muli %arg0, %c7_i32_99 : i32
    %c6_i32_100 = arith.constant 6 : i32
    %306 = arith.addi %305, %c6_i32_100 : i32
    %307 = arith.index_cast %306 : i32 to index
    %308 = memref.load %arg3[%307] : memref<56xi32, #tpu.memory_space<smem>>
    %309 = vector.broadcast %304 : i32 to vector<16x1xi32>
    %310 = arith.cmpi sge, %3, %309 : vector<16x1xi32>
    %311 = vector.broadcast %308 : i32 to vector<16x1xi32>
    %312 = arith.cmpi slt, %3, %311 : vector<16x1xi32>
    %313 = arith.andi %310, %312 : vector<16x1xi1>
    %314 = vector.shape_cast %313 : vector<16x1xi1> to vector<1x16x1xi1>
    %cst_101 = arith.constant -3.40282347E+38 : f32
    %315 = vector.shape_cast %314 : vector<1x16x1xi1> to vector<1x16x1xi1>
    %316 = vector.broadcast %315 : vector<1x16x1xi1> to vector<7x16x8xi1>
    %317 = vector.broadcast %cst_101 : f32 to vector<7x16x8xf32>
    %318 = arith.select %316, %144, %317 : vector<7x16x8xi1>, vector<7x16x8xf32>
    %cst_102 = arith.constant dense<0xFF800000> : vector<7x8xf32>
    %319 = vector.multi_reduction <maximumf>, %318, %cst_102 [1] : vector<7x16x8xf32> to vector<7x8xf32>
    %cst_103 = arith.constant -3.40282347E+38 : f32
    %320 = vector.broadcast %cst_103 : f32 to vector<7x8xf32>
    %321 = arith.cmpf ogt, %319, %320 : vector<7x8xf32>
    %cst_104 = arith.constant 0.000000e+00 : f32
    %322 = vector.broadcast %cst_104 : f32 to vector<7x8xf32>
    %323 = arith.select %321, %319, %322 : vector<7x8xi1>, vector<7x8xf32>
    %c0_105 = arith.constant 0 : index
    %c42 = arith.constant 42 : index
    %c0_106 = arith.constant 0 : index
    %324 = vector.load %arg7[%c0_105, %c42, %c0_106] : memref<1x49x8xf32, #tpu.memory_space<vmem>>, vector<1x7x8xf32>
    %325 = vector.shape_cast %324 : vector<1x7x8xf32> to vector<7x8xf32>
    %326 = vector.shape_cast %323 : vector<7x8xf32> to vector<1x7x8xf32>
    tpu.vector_store %arg7[%c0_105, %c42, %c0_106], %326 {strides = array<i32>} : memref<1x49x8xf32, #tpu.memory_space<vmem>>, vector<1x7x8xf32>,
    return
  }
  func.func @transform_0(%arg0: i32, %arg1: memref<8xi32, #tpu.memory_space<smem>>, %arg2: memref<56xi32, #tpu.memory_space<smem>>, %arg3: memref<56xi32, #tpu.memory_space<smem>>, %arg4: memref<56xi32, #tpu.memory_space<smem>>, %arg5: memref<56xi32, #tpu.memory_space<smem>>) -> (i32, i32, i32, i32) {
    %0 = arith.index_cast %arg0 : i32 to index
    %1 = memref.load %arg1[%0] : memref<8xi32, #tpu.memory_space<smem>>
    %c0_i32 = arith.constant 0 : i32
    %c0_i32_0 = arith.constant 0 : i32
    %c0_i32_1 = arith.constant 0 : i32
    %c0_i32_2 = arith.constant 0 : i32
    return %1, %c0_i32, %c0_i32_0, %c0_i32_1 : i32, i32, i32, i32
  }
  func.func @transform_1(%arg0: i32, %arg1: memref<8xi32, #tpu.memory_space<smem>>, %arg2: memref<56xi32, #tpu.memory_space<smem>>, %arg3: memref<56xi32, #tpu.memory_space<smem>>, %arg4: memref<56xi32, #tpu.memory_space<smem>>, %arg5: memref<56xi32, #tpu.memory_space<smem>>) -> (i32, i32, i32) {
    %c0_i32 = arith.constant 0 : i32
    %c0_i32_0 = arith.constant 0 : i32
    %c0_i32_1 = arith.constant 0 : i32
    return %arg0, %c0_i32, %c0_i32_0 : i32, i32, i32
  }
}

</mosaic_0001>

<llo_original>
// kernel: tpu_custom_call.1
$region0: #{tpu_custom_call.1}
  #allocation0 [shape = 'u32[]', space=smem, size = 0x4, offset = 0x4, fixed_abs, tag = 'smem constant byte address 0x4 - core index']
  #allocation1 [shape = 'u32[144,128]{1,0:T(1,128)}', space=vmem, size = 0x12000, scoped, tag = 'internal scratch']
  #allocation2 [shape = 's32[1]{0}', space=sflag, size = 0x4, scoped, tag = 'scoped memory for tpu_custom_call.1']
  #allocation3 [shape = 'u8[512]{0}', space=smem, size = 0x200, scoped, tag = 'prefetched SMEM operand 0']
  #allocation4 [shape = 'u8[512]{0}', space=smem, size = 0x200, scoped, tag = 'prefetched SMEM operand 1']
  #allocation5 [shape = 'u8[512]{0}', space=smem, size = 0x200, scoped, tag = 'prefetched SMEM operand 2']
  #allocation6 [shape = 'u8[512]{0}', space=smem, size = 0x200, scoped, tag = 'prefetched SMEM operand 3']
  #allocation7 [shape = 'u8[512]{0}', space=smem, size = 0x200, scoped, tag = 'prefetched SMEM operand 4']
  %s0 = inlined_call_operand.vmem [shape: s32[8], index: 0, kind: input, shape index: {}]
  %s1 = inlined_call_operand.vmem [shape: s32[56], index: 1, kind: input, shape index: {}]
  %s2 = inlined_call_operand.vmem [shape: s32[56], index: 2, kind: input, shape index: {}]
  %s3 = inlined_call_operand.vmem [shape: s32[56], index: 3, kind: input, shape index: {}]
  %s4 = inlined_call_operand.vmem [shape: s32[56], index: 4, kind: input, shape index: {}]
  %s5 = inlined_call_operand.vmem [shape: f32[2,16,16,8], index: 5, kind: input, shape index: {}]
  %s6 = inlined_call_operand.vmem [shape: f32[8,49,8], index: 6, kind: output, shape index: {}]
  %s7 = sld [smem:[#allocation0]]
  $region37: #{tpu_custom_call.1} parent=0
    _
  %s9 = ssub.s32 1, %s7
  %s10 = scalar_select 0, %s9, %s7
  %s11 = sshll.u32 %s0, 4
  %s12 = int_to_ptr.vmem [resolvable:$true] %s11
  %14 = dma.vmem_to_smem %s12, 16, [#allocation3], [#allocation2]
  %s15 = sshll.u32 %s1, 4
  %s16 = int_to_ptr.vmem [resolvable:$true] %s15
  %18 = dma.vmem_to_smem %s16, 16, [#allocation4], [#allocation2]
  %s19 = sshll.u32 %s2, 4
  %s20 = int_to_ptr.vmem [resolvable:$true] %s19
  %22 = dma.vmem_to_smem %s20, 16, [#allocation5], [#allocation2]
  %s23 = sshll.u32 %s3, 4
  %s24 = int_to_ptr.vmem [resolvable:$true] %s23
  %26 = dma.vmem_to_smem %s24, 16, [#allocation6], [#allocation2]
  %s27 = sshll.u32 %s4, 4
  %s28 = int_to_ptr.vmem [resolvable:$true] %s27
  %30 = dma.vmem_to_smem %s28, 16, [#allocation7], [#allocation2]
  %31 = dma.done [#allocation2], 80
  %32 = sfence
  loop: start=0, step=1, limit=10
  $region2: #{tpu_custom_call.1} parent=0 // loop_pre_header
    _
  $region3: #{tpu_custom_call.1} parent=0 // loop_header
    %s34 = sphi 0, %s38
    %p35 = scmp.ge.s32.totalorder %s34, 10
    %s46 = sphi 0, %s48
    %s49 = sphi 0, %s46
    %s50 = sphi 0, %s49
    %s66 = sphi 0, %s50
    %s72 = sphi 0, %s74
    %s75 = sphi 0, %s72
    %s76 = sphi 0, %s75
    %s92 = sphi 0, %s76
  $region4: #{tpu_custom_call.1} parent=0 // loop_header_branch
    %37 = sbr.rel (%p35) target = $region8
  $region5: #{tpu_custom_call.1} parent=0 // loop_body
    %s39 = ssub.s32 %s34, 1
    %s40 = ssub.s32 %s34, 2
    %s41 = sadd.s32 %s34, 1
    %s42 = sld [smem:[#allocation3 + %s34]]
    %s43 = sld [smem:[#allocation3 + %s41]]
    %s44 = ssub.s32 %s42, %s43
    %p45 = scmp.eq.s32.totalorder %s44, 0
    %s47 = sadd.s32 %s46, 1
    %s48 = scalar_select %p45, %s46, %s47
    %p51 = pneg %p45
    %p52 = scmp.eq.s32.totalorder %s34, 7
    %p53 = por %p51, %p52
    %p54 = scmp.ne.s32.totalorder %s46, %s49
    %p55 = scmp.eq.s32.totalorder %s34, 0
    %p56 = por %p54, %p55
    %p57 = scmp.ne.s32.totalorder %s46, %s49
    %p58 = scmp.eq.s32.totalorder %s39, 7
    %p59 = por %p57, %p58
    %p60 = scmp.ne.s32.totalorder %s49, %s50
    %p61 = scmp.eq.s32.totalorder %s39, 0
    %p62 = por %p60, %p61
    %p63 = scmp.ne.s32.totalorder %s49, %s50
    %p64 = scmp.eq.s32.totalorder %s40, 7
    %p65 = por %p63, %p64
    %p67 = scmp.ne.s32.totalorder %s50, %s66
    %p68 = scmp.eq.s32.totalorder %s40, 0
    %p69 = por %p67, %p68
    %s70 = ssub.s32 %s34, %s41
    %p71 = scmp.eq.s32.totalorder %s70, 0
    %s73 = sadd.s32 %s72, 1
    %s74 = scalar_select %p71, %s72, %s73
    %p77 = pneg %p71
    %p78 = scmp.eq.s32.totalorder %s34, 7
    %p79 = por %p77, %p78
    %p80 = scmp.ne.s32.totalorder %s72, %s75
    %p81 = scmp.eq.s32.totalorder %s34, 0
    %p82 = por %p80, %p81
    %p83 = scmp.ne.s32.totalorder %s72, %s75
    %p84 = scmp.eq.s32.totalorder %s39, 7
    %p85 = por %p83, %p84
    %p86 = scmp.ne.s32.totalorder %s75, %s76
    %p87 = scmp.eq.s32.totalorder %s39, 0
    %p88 = por %p86, %p87
    %p89 = scmp.ne.s32.totalorder %s75, %s76
    %p90 = scmp.eq.s32.totalorder %s40, 7
    %p91 = por %p89, %p90
    %p93 = scmp.ne.s32.totalorder %s76, %s92
    %p94 = scmp.eq.s32.totalorder %s40, 0
    %p95 = por %p93, %p94
    %p96 = scmp.le.s32.totalorder 1, %s34
    %p97 = scmp.lt.s32.totalorder %s34, 9
    %p98 = pnand %p96, %p97
    %p99 = pneg %p98
    // Predicated region
    $region9: #{tpu_custom_call.1} parent=5 // pred_check
      _
    $region10: #{tpu_custom_call.1} parent=5 // pred_check_branch
      %101 = sbr.rel (%p98) target = $region12
    $region11: #{tpu_custom_call.1} parent=5 // pred_region
      %s102 = ssub.s32 %s34, 1
    $region12: #{tpu_custom_call.1} parent=5 // pred_fallthru
      _
    %p103 = scmp.lt.s32.totalorder %s34, 8
    // Predicated region
    $region13: #{tpu_custom_call.1} parent=5 // pred_check
      %p104 = pneg %p103
    $region14: #{tpu_custom_call.1} parent=5 // pred_check_branch
      %106 = sbr.rel (%p104) target = $region16
    $region15: #{tpu_custom_call.1} parent=5 // pred_region
      // Predicated region
      $region17: #{tpu_custom_call.1} parent=15 // pred_check
        %p107 = pneg %p56
      $region18: #{tpu_custom_call.1} parent=15 // pred_check_branch
        %109 = sbr.rel (%p107) target = $region20
      $region19: #{tpu_custom_call.1} parent=15 // pred_region
        %s110 = sld [smem:[#allocation3 + %s34]]
        %p111 = scmp.lt.s32.totalorder %s110, 1
        %s112 = scalar_select %p111, %s110, 1
        %s113 = smul.addr %s112, 32
        %s114 = smul.addr %s113, 8
        %s115 = scalar_lea.vmem %s5, %s114
        %s116 = sld [smem:[#allocation3 + %s34]]
      $region20: #{tpu_custom_call.1} parent=15 // pred_fallthru
        _
    $region16: #{tpu_custom_call.1} parent=5 // pred_fallthru
      _
    %p117 = scmp.le.s32.totalorder 1, %s34
    %p118 = scmp.lt.s32.totalorder %s34, 9
    %p119 = pnand %p117, %p118
    %p120 = pneg %p119
    // Predicated region
    $region21: #{tpu_custom_call.1} parent=5 // pred_check
      _
    $region22: #{tpu_custom_call.1} parent=5 // pred_check_branch
      %122 = sbr.rel (%p119) target = $region24
    $region23: #{tpu_custom_call.1} parent=5 // pred_region
      %s123 = ssub.s32 %s34, 1
      %s124 = sld [smem:[#allocation3 + %s39]]
      %p125 = scmp.lt.s32.totalorder %s124, 1
      %s126 = scalar_select %p125, %s124, 1
      %s127 = smul.addr %s126, 32
      %s128 = smul.addr %s127, 8
      %s129 = scalar_lea.vmem %s5, %s128
      %p130 = pneg %p62
      %p131 = pneg %p59
      %p132 = pneg %p88
      %p133 = pneg %p85
      %p134 = scmp.lt.s32.totalorder %s39, 7
      %s135 = scalar_select %p134, %s39, 7
      %s136 = smul.addr %s135, 7
      %s137 = smul.addr %s136, 8
      %s138 = scalar_lea.vmem %s6, %s137
      %s139 = sld [smem:[#allocation3 + %s39]]
      %p140 = scmp.lt.s32.totalorder %s139, 1
      %s141 = scalar_select %p140, %s139, 1
      %s142 = smul.addr %s141, 32
      %s143 = smul.addr %s142, 8
      %s144 = scalar_lea.vmem %s5, %s143
      %s145 = sld [smem:[#allocation3 + %s39]]
      %p146 = scmp.lt.s32.totalorder %s39, 7
      %s147 = scalar_select %p146, %s39, 7
      %s148 = smul.addr %s147, 7
      %s149 = smul.addr %s148, 8
      %s150 = scalar_lea.vmem %s6, %s149
      %v151 = vld [vmem:[%s144] sm:$0xff]
      %v152 = vld [vmem:[%s144 + $0x8] sm:$0xff]
      %v153 = vld [vmem:[%s144 + $0x10] sm:$0xff]
      %v154 = vld [vmem:[%s144 + $0x18] sm:$0xff]
      %v155 = vld [vmem:[%s144 + $0x20] sm:$0xff]
      %v156 = vld [vmem:[%s144 + $0x28] sm:$0xff]
      %v157 = vld [vmem:[%s144 + $0x30] sm:$0xff]
      %v158 = vld [vmem:[%s144 + $0x38] sm:$0xff]
      %v159 = vld [vmem:[%s144 + $0x40] sm:$0xff]
      %v160 = vld [vmem:[%s144 + $0x48] sm:$0xff]
      %v161 = vld [vmem:[%s144 + $0x50] sm:$0xff]
      %v162 = vld [vmem:[%s144 + $0x58] sm:$0xff]
      %v163 = vld [vmem:[%s144 + $0x60] sm:$0xff]
      %v164 = vld [vmem:[%s144 + $0x68] sm:$0xff]
      %v165 = vld [vmem:[%s144 + $0x70] sm:$0xff]
      %v166 = vld [vmem:[%s144 + $0x78] sm:$0xff]
      %v167 = vld [vmem:[%s144 + $0x80] sm:$0xff]
      %v168 = vld [vmem:[%s144 + $0x88] sm:$0xff]
      %v169 = vld [vmem:[%s144 + $0x90] sm:$0xff]
      %v170 = vld [vmem:[%s144 + $0x98] sm:$0xff]
      %v171 = vld [vmem:[%s144 + $0xa0] sm:$0xff]
      %v172 = vld [vmem:[%s144 + $0xa8] sm:$0xff]
      %v173 = vld [vmem:[%s144 + $0xb0] sm:$0xff]
      %v174 = vld [vmem:[%s144 + $0xb8] sm:$0xff]
      %v175 = vld [vmem:[%s144 + $0xc0] sm:$0xff]
      %v176 = vld [vmem:[%s144 + $0xc8] sm:$0xff]
      %v177 = vld [vmem:[%s144 + $0xd0] sm:$0xff]
      %v178 = vld [vmem:[%s144 + $0xd8] sm:$0xff]
      %v179 = vld [vmem:[%s144 + $0xe0] sm:$0xff]
      %v180 = vld [vmem:[%s144 + $0xe8] sm:$0xff]
      %v181 = vld [vmem:[%s144 + $0xf0] sm:$0xff]
      %v182 = vld [vmem:[%s144 + $0xf8] sm:$0xff]
      %v183 = vlaneseq
      %v184 = vshrl.u32 %v183, 7
      %v185 = vadd.s32 %v184, 8
      %s186 = smul.u32 %s39, 7
      %s187 = sld [smem:[#allocation6 + %s186]]
      %s188 = sld [smem:[#allocation7 + %s186]]
      %v189 = vstv %s187
      %vm190 = vcmp.ge.s32.totalorder %v184, %v189
      %vm191 = vcmp.ge.s32.totalorder %v185, %v189
      %v192 = vstv %s188
      %vm193 = vcmp.lt.s32.totalorder %v184, %v192
      %vm194 = vcmp.lt.s32.totalorder %v185, %v192
      %vm195 = vmand %vm190, %vm193
      %vm196 = vmand %vm191, %vm194
      %v197 = vsel %vm195, 1, 0
      %v198 = vsel %vm196, 1, 0
      %vm199 = vcmp.eq.s32.totalorder %v197, 1
      %vm200 = vcmp.eq.s32.totalorder %v198, 1
      %v201 = vsel %vm199, %v151, -3.4028235e+38
      %v202 = vsel %vm200, %v152, -3.4028235e+38
      %v203 = vsel %vm199, %v153, -3.4028235e+38
      %v204 = vsel %vm200, %v154, -3.4028235e+38
      %v205 = vsel %vm199, %v155, -3.4028235e+38
      %v206 = vsel %vm200, %v156, -3.4028235e+38
      %v207 = vsel %vm199, %v157, -3.4028235e+38
      %v208 = vsel %vm200, %v158, -3.4028235e+38
      %v209 = vsel %vm199, %v159, -3.4028235e+38
      %v210 = vsel %vm200, %v160, -3.4028235e+38
      %v211 = vsel %vm199, %v161, -3.4028235e+38
      %v212 = vsel %vm200, %v162, -3.4028235e+38
      %v213 = vsel %vm199, %v163, -3.4028235e+38
      %v214 = vsel %vm200, %v164, -3.4028235e+38
      %v215 = vsel %vm199, %v165, -3.4028235e+38
      %v216 = vsel %vm200, %v166, -3.4028235e+38
      %v217 = vsel %vm199, %v167, -3.4028235e+38
      %v218 = vsel %vm200, %v168, -3.4028235e+38
      %v219 = vsel %vm199, %v169, -3.4028235e+38
      %v220 = vsel %vm200, %v170, -3.4028235e+38
      %v221 = vsel %vm199, %v171, -3.4028235e+38
      %v222 = vsel %vm200, %v172, -3.4028235e+38
      %v223 = vsel %vm199, %v173, -3.4028235e+38
      %v224 = vsel %vm200, %v174, -3.4028235e+38
      %v225 = vsel %vm199, %v175, -3.4028235e+38
      %v226 = vsel %vm200, %v176, -3.4028235e+38
      %v227 = vsel %vm199, %v177, -3.4028235e+38
      %v228 = vsel %vm200, %v178, -3.4028235e+38
      %v229 = vsel %vm199, %v179, -3.4028235e+38
      %v230 = vsel %vm200, %v180, -3.4028235e+38
      %v231 = vsel %vm199, %v181, -3.4028235e+38
      %v232 = vsel %vm200, %v182, -3.4028235e+38
      %vm233 = vcmask 64512
      %v234 = vsel %vm233, %v201, -inf
      %v235 = vsel %vm233, %v202, -inf
      %v236 = vmax.f32 %v234, %v235
      %v237 = vrot.slane %v236, 4
      %v238 = vmax.f32 %v236, %v237
      %v239 = vrot.slane %v238, 2
      %v240 = vmax.f32 %v238, %v239
      %v241 = vrot.slane %v240, 1
      %v242 = vmax.f32 %v240, %v241
      %v243 = vsel %vm233, %v203, -inf
      %v244 = vsel %vm233, %v204, -inf
      %v245 = vmax.f32 %v243, %v244
      %v246 = vrot.slane %v245, 4
      %v247 = vmax.f32 %v245, %v246
      %v248 = vrot.slane %v247, 2
      %v249 = vmax.f32 %v247, %v248
      %v250 = vrot.slane %v249, 1
      %v251 = vmax.f32 %v249, %v250
      %v252 = vsel %vm233, %v205, -inf
      %v253 = vsel %vm233, %v206, -inf
      %v254 = vmax.f32 %v252, %v253
      %v255 = vrot.slane %v254, 4
      %v256 = vmax.f32 %v254, %v255
      %v257 = vrot.slane %v256, 2
      %v258 = vmax.f32 %v256, %v257
      %v259 = vrot.slane %v258, 1
      %v260 = vmax.f32 %v258, %v259
      %v261 = vsel %vm233, %v207, -inf
      %v262 = vsel %vm233, %v208, -inf
      %v263 = vmax.f32 %v261, %v262
      %v264 = vrot.slane %v263, 4
      %v265 = vmax.f32 %v263, %v264
      %v266 = vrot.slane %v265, 2
      %v267 = vmax.f32 %v265, %v266
      %v268 = vrot.slane %v267, 1
      %v269 = vmax.f32 %v267, %v268
      %v270 = vsel %vm233, %v209, -inf
      %v271 = vsel %vm233, %v210, -inf
      %v272 = vmax.f32 %v270, %v271
      %v273 = vrot.slane %v272, 4
      %v274 = vmax.f32 %v272, %v273
      %v275 = vrot.slane %v274, 2
      %v276 = vmax.f32 %v274, %v275
      %v277 = vrot.slane %v276, 1
      %v278 = vmax.f32 %v276, %v277
      %v279 = vsel %vm233, %v211, -inf
      %v280 = vsel %vm233, %v212, -inf
      %v281 = vmax.f32 %v279, %v280
      %v282 = vrot.slane %v281, 4
      %v283 = vmax.f32 %v281, %v282
      %v284 = vrot.slane %v283, 2
      %v285 = vmax.f32 %v283, %v284
      %v286 = vrot.slane %v285, 1
      %v287 = vmax.f32 %v285, %v286
      %v288 = vsel %vm233, %v213, -inf
      %v289 = vsel %vm233, %v214, -inf
      %v290 = vmax.f32 %v288, %v289
      %v291 = vrot.slane %v290, 4
      %v292 = vmax.f32 %v290, %v291
      %v293 = vrot.slane %v292, 2
      %v294 = vmax.f32 %v292, %v293
      %v295 = vrot.slane %v294, 1
      %v296 = vmax.f32 %v294, %v295
      %v297 = vsel %vm233, %v215, -inf
      %v298 = vsel %vm233, %v216, -inf
      %v299 = vmax.f32 %v297, %v298
      %v300 = vrot.slane %v299, 4
      %v301 = vmax.f32 %v299, %v300
      %v302 = vrot.slane %v301, 2
      %v303 = vmax.f32 %v301, %v302
      %v304 = vrot.slane %v303, 1
      %v305 = vmax.f32 %v303, %v304
      %v306 = vsel %vm233, %v217, -inf
      %v307 = vsel %vm233, %v218, -inf
      %v308 = vmax.f32 %v306, %v307
      %v309 = vrot.slane %v308, 4
      %v310 = vmax.f32 %v308, %v309
      %v311 = vrot.slane %v310, 2
      %v312 = vmax.f32 %v310, %v311
      %v313 = vrot.slane %v312, 1
      %v314 = vmax.f32 %v312, %v313
      %v315 = vsel %vm233, %v219, -inf
      %v316 = vsel %vm233, %v220, -inf
      %v317 = vmax.f32 %v315, %v316
      %v318 = vrot.slane %v317, 4
      %v319 = vmax.f32 %v317, %v318
      %v320 = vrot.slane %v319, 2
      %v321 = vmax.f32 %v319, %v320
      %v322 = vrot.slane %v321, 1
      %v323 = vmax.f32 %v321, %v322
      %v324 = vsel %vm233, %v221, -inf
      %v325 = vsel %vm233, %v222, -inf
      %v326 = vmax.f32 %v324, %v325
      %v327 = vrot.slane %v326, 4
      %v328 = vmax.f32 %v326, %v327
      %v329 = vrot.slane %v328, 2
      %v330 = vmax.f32 %v328, %v329
      %v331 = vrot.slane %v330, 1
      %v332 = vmax.f32 %v330, %v331
      %v333 = vsel %vm233, %v223, -inf
      %v334 = vsel %vm233, %v224, -inf
      %v335 = vmax.f32 %v333, %v334
      %v336 = vrot.slane %v335, 4
      %v337 = vmax.f32 %v335, %v336
      %v338 = vrot.slane %v337, 2
      %v339 = vmax.f32 %v337, %v338
      %v340 = vrot.slane %v339, 1
      %v341 = vmax.f32 %v339, %v340
      %v342 = vsel %vm233, %v225, -inf
      %v343 = vsel %vm233, %v226, -inf
      %v344 = vmax.f32 %v342, %v343
      %v345 = vrot.slane %v344, 4
      %v346 = vmax.f32 %v344, %v345
      %v347 = vrot.slane %v346, 2
      %v348 = vmax.f32 %v346, %v347
      %v349 = vrot.slane %v348, 1
      %v350 = vmax.f32 %v348, %v349
      %v351 = vsel %vm233, %v227, -inf
      %v352 = vsel %vm233, %v228, -inf
      %v353 = vmax.f32 %v351, %v352
      %v354 = vrot.slane %v353, 4
      %v355 = vmax.f32 %v353, %v354
      %v356 = vrot.slane %v355, 2
      %v357 = vmax.f32 %v355, %v356
      %v358 = vrot.slane %v357, 1
      %v359 = vmax.f32 %v357, %v358
      %v360 = vsel %vm233, %v229, -inf
      %v361 = vsel %vm233, %v230, -inf
      %v362 = vmax.f32 %v360, %v361
      %v363 = vrot.slane %v362, 4
      %v364 = vmax.f32 %v362, %v363
      %v365 = vrot.slane %v364, 2
      %v366 = vmax.f32 %v364, %v365
      %v367 = vrot.slane %v366, 1
      %v368 = vmax.f32 %v366, %v367
      %v369 = vsel %vm233, %v231, -inf
      %v370 = vsel %vm233, %v232, -inf
      %v371 = vmax.f32 %v369, %v370
      %v372 = vrot.slane %v371, 4
      %v373 = vmax.f32 %v371, %v372
      %v374 = vrot.slane %v373, 2
      %v375 = vmax.f32 %v373, %v374
      %v376 = vrot.slane %v375, 1
      %v377 = vmax.f32 %v375, %v376
      %s378 = sadd.s32 %s186, 1
      %s379 = sld [smem:[#allocation6 + %s378]]
      %s380 = sld [smem:[#allocation7 + %s378]]
      %v381 = vstv %s379
      %vm382 = vcmp.ge.s32.totalorder %v184, %v381
      %vm383 = vcmp.ge.s32.totalorder %v185, %v381
      %v384 = vstv %s380
      %vm385 = vcmp.lt.s32.totalorder %v184, %v384
      %vm386 = vcmp.lt.s32.totalorder %v185, %v384
      %vm387 = vmand %vm382, %vm385
      %vm388 = vmand %vm383, %vm386
      %v389 = vsel %vm387, 1, 0
      %v390 = vsel %vm388, 1, 0
      %vm391 = vcmp.eq.s32.totalorder %v389, 1
      %vm392 = vcmp.eq.s32.totalorder %v390, 1
      %v393 = vsel %vm391, %v151, -3.4028235e+38
      %v394 = vsel %vm392, %v152, -3.4028235e+38
      %v395 = vsel %vm391, %v153, -3.4028235e+38
      %v396 = vsel %vm392, %v154, -3.4028235e+38
      %v397 = vsel %vm391, %v155, -3.4028235e+38
      %v398 = vsel %vm392, %v156, -3.4028235e+38
      %v399 = vsel %vm391, %v157, -3.4028235e+38
      %v400 = vsel %vm392, %v158, -3.4028235e+38
      %v401 = vsel %vm391, %v159, -3.4028235e+38
      %v402 = vsel %vm392, %v160, -3.4028235e+38
      %v403 = vsel %vm391, %v161, -3.4028235e+38
      %v404 = vsel %vm392, %v162, -3.4028235e+38
      %v405 = vsel %vm391, %v163, -3.4028235e+38
      %v406 = vsel %vm392, %v164, -3.4028235e+38
      %v407 = vsel %vm391, %v165, -3.4028235e+38
      %v408 = vsel %vm392, %v166, -3.4028235e+38
      %v409 = vsel %vm391, %v167, -3.4028235e+38
      %v410 = vsel %vm392, %v168, -3.4028235e+38
      %v411 = vsel %vm391, %v169, -3.4028235e+38
      %v412 = vsel %vm392, %v170, -3.4028235e+38
      %v413 = vsel %vm391, %v171, -3.4028235e+38
      %v414 = vsel %vm392, %v172, -3.4028235e+38
      %v415 = vsel %vm391, %v173, -3.4028235e+38
      %v416 = vsel %vm392, %v174, -3.4028235e+38
      %v417 = vsel %vm391, %v175, -3.4028235e+38
      %v418 = vsel %vm392, %v176, -3.4028235e+38
      %v419 = vsel %vm391, %v177, -3.4028235e+38
      %v420 = vsel %vm392, %v178, -3.4028235e+38
      %v421 = vsel %vm391, %v179, -3.4028235e+38
      %v422 = vsel %vm392, %v180, -3.4028235e+38
      %v423 = vsel %vm391, %v181, -3.4028235e+38
      %v424 = vsel %vm392, %v182, -3.4028235e+38
      %v425 = vsel %vm233, %v393, -inf
      %v426 = vsel %vm233, %v394, -inf
      %v427 = vmax.f32 %v425, %v426
      %v428 = vrot.slane %v427, 4
      %v429 = vmax.f32 %v427, %v428
      %v430 = vrot.slane %v429, 2
      %v431 = vmax.f32 %v429, %v430
      %v432 = vrot.slane %v431, 1
      %v433 = vmax.f32 %v431, %v432
      %v434 = vsel %vm233, %v395, -inf
      %v435 = vsel %vm233, %v396, -inf
      %v436 = vmax.f32 %v434, %v435
      %v437 = vrot.slane %v436, 4
      %v438 = vmax.f32 %v436, %v437
      %v439 = vrot.slane %v438, 2
      %v440 = vmax.f32 %v438, %v439
      %v441 = vrot.slane %v440, 1
      %v442 = vmax.f32 %v440, %v441
      %v443 = vsel %vm233, %v397, -inf
      %v444 = vsel %vm233, %v398, -inf
      %v445 = vmax.f32 %v443, %v444
      %v446 = vrot.slane %v445, 4
      %v447 = vmax.f32 %v445, %v446
      %v448 = vrot.slane %v447, 2
      %v449 = vmax.f32 %v447, %v448
      %v450 = vrot.slane %v449, 1
      %v451 = vmax.f32 %v449, %v450
      %v452 = vsel %vm233, %v399, -inf
      %v453 = vsel %vm233, %v400, -inf
      %v454 = vmax.f32 %v452, %v453
      %v455 = vrot.slane %v454, 4
      %v456 = vmax.f32 %v454, %v455
      %v457 = vrot.slane %v456, 2
      %v458 = vmax.f32 %v456, %v457
      %v459 = vrot.slane %v458, 1
      %v460 = vmax.f32 %v458, %v459
      %v461 = vsel %vm233, %v401, -inf
      %v462 = vsel %vm233, %v402, -inf
      %v463 = vmax.f32 %v461, %v462
      %v464 = vrot.slane %v463, 4
      %v465 = vmax.f32 %v463, %v464
      %v466 = vrot.slane %v465, 2
      %v467 = vmax.f32 %v465, %v466
      %v468 = vrot.slane %v467, 1
      %v469 = vmax.f32 %v467, %v468
      %v470 = vsel %vm233, %v403, -inf
      %v471 = vsel %vm233, %v404, -inf
      %v472 = vmax.f32 %v470, %v471
      %v473 = vrot.slane %v472, 4
      %v474 = vmax.f32 %v472, %v473
      %v475 = vrot.slane %v474, 2
      %v476 = vmax.f32 %v474, %v475
      %v477 = vrot.slane %v476, 1
      %v478 = vmax.f32 %v476, %v477
      %v479 = vsel %vm233, %v405, -inf
      %v480 = vsel %vm233, %v406, -inf
      %v481 = vmax.f32 %v479, %v480
      %v482 = vrot.slane %v481, 4
      %v483 = vmax.f32 %v481, %v482
      %v484 = vrot.slane %v483, 2
      %v485 = vmax.f32 %v483, %v484
      %v486 = vrot.slane %v485, 1
      %v487 = vmax.f32 %v485, %v486
      %v488 = vsel %vm233, %v407, -inf
      %v489 = vsel %vm233, %v408, -inf
      %v490 = vmax.f32 %v488, %v489
      %v491 = vrot.slane %v490, 4
      %v492 = vmax.f32 %v490, %v491
      %v493 = vrot.slane %v492, 2
      %v494 = vmax.f32 %v492, %v493
      %v495 = vrot.slane %v494, 1
      %v496 = vmax.f32 %v494, %v495
      %v497 = vsel %vm233, %v409, -inf
      %v498 = vsel %vm233, %v410, -inf
      %v499 = vmax.f32 %v497, %v498
      %v500 = vrot.slane %v499, 4
      %v501 = vmax.f32 %v499, %v500
      %v502 = vrot.slane %v501, 2
      %v503 = vmax.f32 %v501, %v502
      %v504 = vrot.slane %v503, 1
      %v505 = vmax.f32 %v503, %v504
      %v506 = vsel %vm233, %v411, -inf
      %v507 = vsel %vm233, %v412, -inf
      %v508 = vmax.f32 %v506, %v507
      %v509 = vrot.slane %v508, 4
      %v510 = vmax.f32 %v508, %v509
      %v511 = vrot.slane %v510, 2
      %v512 = vmax.f32 %v510, %v511
      %v513 = vrot.slane %v512, 1
      %v514 = vmax.f32 %v512, %v513
      %v515 = vsel %vm233, %v413, -inf
      %v516 = vsel %vm233, %v414, -inf
      %v517 = vmax.f32 %v515, %v516
      %v518 = vrot.slane %v517, 4
      %v519 = vmax.f32 %v517, %v518
      %v520 = vrot.slane %v519, 2
      %v521 = vmax.f32 %v519, %v520
      %v522 = vrot.slane %v521, 1
      %v523 = vmax.f32 %v521, %v522
      %v524 = vsel %vm233, %v415, -inf
      %v525 = vsel %vm233, %v416, -inf
      %v526 = vmax.f32 %v524, %v525
      %v527 = vrot.slane %v526, 4
      %v528 = vmax.f32 %v526, %v527
      %v529 = vrot.slane %v528, 2
      %v530 = vmax.f32 %v528, %v529
      %v531 = vrot.slane %v530, 1
      %v532 = vmax.f32 %v530, %v531
      %v533 = vsel %vm233, %v417, -inf
      %v534 = vsel %vm233, %v418, -inf
      %v535 = vmax.f32 %v533, %v534
      %v536 = vrot.slane %v535, 4
      %v537 = vmax.f32 %v535, %v536
      %v538 = vrot.slane %v537, 2
      %v539 = vmax.f32 %v537, %v538
      %v540 = vrot.slane %v539, 1
      %v541 = vmax.f32 %v539, %v540
      %v542 = vsel %vm233, %v419, -inf
      %v543 = vsel %vm233, %v420, -inf
      %v544 = vmax.f32 %v542, %v543
      %v545 = vrot.slane %v544, 4
      %v546 = vmax.f32 %v544, %v545
      %v547 = vrot.slane %v546, 2
      %v548 = vmax.f32 %v546, %v547
      %v549 = vrot.slane %v548, 1
      %v550 = vmax.f32 %v548, %v549
      %v551 = vsel %vm233, %v421, -inf
      %v552 = vsel %vm233, %v422, -inf
      %v553 = vmax.f32 %v551, %v552
      %v554 = vrot.slane %v553, 4
      %v555 = vmax.f32 %v553, %v554
      %v556 = vrot.slane %v555, 2
      %v557 = vmax.f32 %v555, %v556
      %v558 = vrot.slane %v557, 1
      %v559 = vmax.f32 %v557, %v558
      %v560 = vsel %vm233, %v423, -inf
      %v561 = vsel %vm233, %v424, -inf
      %v562 = vmax.f32 %v560, %v561
      %v563 = vrot.slane %v562, 4
      %v564 = vmax.f32 %v562, %v563
      %v565 = vrot.slane %v564, 2
      %v566 = vmax.f32 %v564, %v565
      %v567 = vrot.slane %v566, 1
      %v568 = vmax.f32 %v566, %v567
      %s569 = sadd.s32 %s186, 2
      %s570 = sld [smem:[#allocation6 + %s569]]
      %s571 = sld [smem:[#allocation7 + %s569]]
      %v572 = vstv %s570
      %vm573 = vcmp.ge.s32.totalorder %v184, %v572
      %vm574 = vcmp.ge.s32.totalorder %v185, %v572
      %v575 = vstv %s571
      %vm576 = vcmp.lt.s32.totalorder %v184, %v575
      %vm577 = vcmp.lt.s32.totalorder %v185, %v575
      %vm578 = vmand %vm573, %vm576
      %vm579 = vmand %vm574, %vm577
      %v580 = vsel %vm578, 1, 0
      %v581 = vsel %vm579, 1, 0
      %vm582 = vcmp.eq.s32.totalorder %v580, 1
      %vm583 = vcmp.eq.s32.totalorder %v581, 1
      %v584 = vsel %vm582, %v151, -3.4028235e+38
      %v585 = vsel %vm583, %v152, -3.4028235e+38
      %v586 = vsel %vm582, %v153, -3.4028235e+38
      %v587 = vsel %vm583, %v154, -3.4028235e+38
      %v588 = vsel %vm582, %v155, -3.4028235e+38
      %v589 = vsel %vm583, %v156, -3.4028235e+38
      %v590 = vsel %vm582, %v157, -3.4028235e+38
      %v591 = vsel %vm583, %v158, -3.4028235e+38
      %v592 = vsel %vm582, %v159, -3.4028235e+38
      %v593 = vsel %vm583, %v160, -3.4028235e+38
      %v594 = vsel %vm582, %v161, -3.4028235e+38
      %v595 = vsel %vm583, %v162, -3.4028235e+38
      %v596 = vsel %vm582, %v163, -3.4028235e+38
      %v597 = vsel %vm583, %v164, -3.4028235e+38
      %v598 = vsel %vm582, %v165, -3.4028235e+38
      %v599 = vsel %vm583, %v166, -3.4028235e+38
      %v600 = vsel %vm582, %v167, -3.4028235e+38
      %v601 = vsel %vm583, %v168, -3.4028235e+38
      %v602 = vsel %vm582, %v169, -3.4028235e+38
      %v603 = vsel %vm583, %v170, -3.4028235e+38
      %v604 = vsel %vm582, %v171, -3.4028235e+38
      %v605 = vsel %vm583, %v172, -3.4028235e+38
      %v606 = vsel %vm582, %v173, -3.4028235e+38
      %v607 = vsel %vm583, %v174, -3.4028235e+38
      %v608 = vsel %vm582, %v175, -3.4028235e+38
      %v609 = vsel %vm583, %v176, -3.4028235e+38
      %v610 = vsel %vm582, %v177, -3.4028235e+38
      %v611 = vsel %vm583, %v178, -3.4028235e+38
      %v612 = vsel %vm582, %v179, -3.4028235e+38
      %v613 = vsel %vm583, %v180, -3.4028235e+38
      %v614 = vsel %vm582, %v181, -3.4028235e+38
      %v615 = vsel %vm583, %v182, -3.4028235e+38
      %v616 = vsel %vm233, %v584, -inf
      %v617 = vsel %vm233, %v585, -inf
      %v618 = vmax.f32 %v616, %v617
      %v619 = vrot.slane %v618, 4
      %v620 = vmax.f32 %v618, %v619
      %v621 = vrot.slane %v620, 2
      %v622 = vmax.f32 %v620, %v621
      %v623 = vrot.slane %v622, 1
      %v624 = vmax.f32 %v622, %v623
      %v625 = vsel %vm233, %v586, -inf
      %v626 = vsel %vm233, %v587, -inf
      %v627 = vmax.f32 %v625, %v626
      %v628 = vrot.slane %v627, 4
      %v629 = vmax.f32 %v627, %v628
      %v630 = vrot.slane %v629, 2
      %v631 = vmax.f32 %v629, %v630
      %v632 = vrot.slane %v631, 1
      %v633 = vmax.f32 %v631, %v632
      %v634 = vsel %vm233, %v588, -inf
      %v635 = vsel %vm233, %v589, -inf
      %v636 = vmax.f32 %v634, %v635
      %v637 = vrot.slane %v636, 4
      %v638 = vmax.f32 %v636, %v637
      %v639 = vrot.slane %v638, 2
      %v640 = vmax.f32 %v638, %v639
      %v641 = vrot.slane %v640, 1
      %v642 = vmax.f32 %v640, %v641
      %v643 = vsel %vm233, %v590, -inf
      %v644 = vsel %vm233, %v591, -inf
      %v645 = vmax.f32 %v643, %v644
      %v646 = vrot.slane %v645, 4
      %v647 = vmax.f32 %v645, %v646
      %v648 = vrot.slane %v647, 2
      %v649 = vmax.f32 %v647, %v648
      %v650 = vrot.slane %v649, 1
      %v651 = vmax.f32 %v649, %v650
      %v652 = vsel %vm233, %v592, -inf
      %v653 = vsel %vm233, %v593, -inf
      %v654 = vmax.f32 %v652, %v653
      %v655 = vrot.slane %v654, 4
      %v656 = vmax.f32 %v654, %v655
      %v657 = vrot.slane %v656, 2
      %v658 = vmax.f32 %v656, %v657
      %v659 = vrot.slane %v658, 1
      %v660 = vmax.f32 %v658, %v659
      %v661 = vsel %vm233, %v594, -inf
      %v662 = vsel %vm233, %v595, -inf
      %v663 = vmax.f32 %v661, %v662
      %v664 = vrot.slane %v663, 4
      %v665 = vmax.f32 %v663, %v664
      %v666 = vrot.slane %v665, 2
      %v667 = vmax.f32 %v665, %v666
      %v668 = vrot.slane %v667, 1
      %v669 = vmax.f32 %v667, %v668
      %v670 = vsel %vm233, %v596, -inf
      %v671 = vsel %vm233, %v597, -inf
      %v672 = vmax.f32 %v670, %v671
      %v673 = vrot.slane %v672, 4
      %v674 = vmax.f32 %v672, %v673
      %v675 = vrot.slane %v674, 2
      %v676 = vmax.f32 %v674, %v675
      %v677 = vrot.slane %v676, 1
      %v678 = vmax.f32 %v676, %v677
      %v679 = vsel %vm233, %v598, -inf
      %v680 = vsel %vm233, %v599, -inf
      %v681 = vmax.f32 %v679, %v680
      %v682 = vrot.slane %v681, 4
      %v683 = vmax.f32 %v681, %v682
      %v684 = vrot.slane %v683, 2
      %v685 = vmax.f32 %v683, %v684
      %v686 = vrot.slane %v685, 1
      %v687 = vmax.f32 %v685, %v686
      %v688 = vsel %vm233, %v600, -inf
      %v689 = vsel %vm233, %v601, -inf
      %v690 = vmax.f32 %v688, %v689
      %v691 = vrot.slane %v690, 4
      %v692 = vmax.f32 %v690, %v691
      %v693 = vrot.slane %v692, 2
      %v694 = vmax.f32 %v692, %v693
      %v695 = vrot.slane %v694, 1
      %v696 = vmax.f32 %v694, %v695
      %v697 = vsel %vm233, %v602, -inf
      %v698 = vsel %vm233, %v603, -inf
      %v699 = vmax.f32 %v697, %v698
      %v700 = vrot.slane %v699, 4
      %v701 = vmax.f32 %v699, %v700
      %v702 = vrot.slane %v701, 2
      %v703 = vmax.f32 %v701, %v702
      %v704 = vrot.slane %v703, 1
      %v705 = vmax.f32 %v703, %v704
      %v706 = vsel %vm233, %v604, -inf
      %v707 = vsel %vm233, %v605, -inf
      %v708 = vmax.f32 %v706, %v707
      %v709 = vrot.slane %v708, 4
      %v710 = vmax.f32 %v708, %v709
      %v711 = vrot.slane %v710, 2
      %v712 = vmax.f32 %v710, %v711
      %v713 = vrot.slane %v712, 1
      %v714 = vmax.f32 %v712, %v713
      %v715 = vsel %vm233, %v606, -inf
      %v716 = vsel %vm233, %v607, -inf
      %v717 = vmax.f32 %v715, %v716
      %v718 = vrot.slane %v717, 4
      %v719 = vmax.f32 %v717, %v718
      %v720 = vrot.slane %v719, 2
      %v721 = vmax.f32 %v719, %v720
      %v722 = vrot.slane %v721, 1
      %v723 = vmax.f32 %v721, %v722
      %v724 = vsel %vm233, %v608, -inf
      %v725 = vsel %vm233, %v609, -inf
      %v726 = vmax.f32 %v724, %v725
      %v727 = vrot.slane %v726, 4
      %v728 = vmax.f32 %v726, %v727
      %v729 = vrot.slane %v728, 2
      %v730 = vmax.f32 %v728, %v729
      %v731 = vrot.slane %v730, 1
      %v732 = vmax.f32 %v730, %v731
      %v733 = vsel %vm233, %v610, -inf
      %v734 = vsel %vm233, %v611, -inf
      %v735 = vmax.f32 %v733, %v734
      %v736 = vrot.slane %v735, 4
      %v737 = vmax.f32 %v735, %v736
      %v738 = vrot.slane %v737, 2
      %v739 = vmax.f32 %v737, %v738
      %v740 = vrot.slane %v739, 1
      %v741 = vmax.f32 %v739, %v740
      %v742 = vsel %vm233, %v612, -inf
      %v743 = vsel %vm233, %v613, -inf
      %v744 = vmax.f32 %v742, %v743
      %v745 = vrot.slane %v744, 4
      %v746 = vmax.f32 %v744, %v745
      %v747 = vrot.slane %v746, 2
      %v748 = vmax.f32 %v746, %v747
      %v749 = vrot.slane %v748, 1
      %v750 = vmax.f32 %v748, %v749
      %v751 = vsel %vm233, %v614, -inf
      %v752 = vsel %vm233, %v615, -inf
      %v753 = vmax.f32 %v751, %v752
      %v754 = vrot.slane %v753, 4
      %v755 = vmax.f32 %v753, %v754
      %v756 = vrot.slane %v755, 2
      %v757 = vmax.f32 %v755, %v756
      %v758 = vrot.slane %v757, 1
      %v759 = vmax.f32 %v757, %v758
      %s760 = sadd.s32 %s186, 3
      %s761 = sld [smem:[#allocation6 + %s760]]
      %s762 = sld [smem:[#allocation7 + %s760]]
      %v763 = vstv %s761
      %vm764 = vcmp.ge.s32.totalorder %v184, %v763
      %vm765 = vcmp.ge.s32.totalorder %v185, %v763
      %v766 = vstv %s762
      %vm767 = vcmp.lt.s32.totalorder %v184, %v766
      %vm768 = vcmp.lt.s32.totalorder %v185, %v766
      %vm769 = vmand %vm764, %vm767
      %vm770 = vmand %vm765, %vm768
      %v771 = vsel %vm769, 1, 0
      %v772 = vsel %vm770, 1, 0
      %vm773 = vcmp.eq.s32.totalorder %v771, 1
      %vm774 = vcmp.eq.s32.totalorder %v772, 1
      %v775 = vsel %vm773, %v151, -3.4028235e+38
      %v776 = vsel %vm774, %v152, -3.4028235e+38
      %v777 = vsel %vm773, %v153, -3.4028235e+38
      %v778 = vsel %vm774, %v154, -3.4028235e+38
      %v779 = vsel %vm773, %v155, -3.4028235e+38
      %v780 = vsel %vm774, %v156, -3.4028235e+38
      %v781 = vsel %vm773, %v157, -3.4028235e+38
      %v782 = vsel %vm774, %v158, -3.4028235e+38
      %v783 = vsel %vm773, %v159, -3.4028235e+38
      %v784 = vsel %vm774, %v160, -3.4028235e+38
      %v785 = vsel %vm773, %v161, -3.4028235e+38
      %v786 = vsel %vm774, %v162, -3.4028235e+38
      %v787 = vsel %vm773, %v163, -3.4028235e+38
      %v788 = vsel %vm774, %v164, -3.4028235e+38
      %v789 = vsel %vm773, %v165, -3.4028235e+38
      %v790 = vsel %vm774, %v166, -3.4028235e+38
      %v791 = vsel %vm773, %v167, -3.4028235e+38
      %v792 = vsel %vm774, %v168, -3.4028235e+38
      %v793 = vsel %vm773, %v169, -3.4028235e+38
      %v794 = vsel %vm774, %v170, -3.4028235e+38
      %v795 = vsel %vm773, %v171, -3.4028235e+38
      %v796 = vsel %vm774, %v172, -3.4028235e+38
      %v797 = vsel %vm773, %v173, -3.4028235e+38
      %v798 = vsel %vm774, %v174, -3.4028235e+38
      %v799 = vsel %vm773, %v175, -3.4028235e+38
      %v800 = vsel %vm774, %v176, -3.4028235e+38
      %v801 = vsel %vm773, %v177, -3.4028235e+38
      %v802 = vsel %vm774, %v178, -3.4028235e+38
      %v803 = vsel %vm773, %v179, -3.4028235e+38
      %v804 = vsel %vm774, %v180, -3.4028235e+38
      %v805 = vsel %vm773, %v181, -3.4028235e+38
      %v806 = vsel %vm774, %v182, -3.4028235e+38
      %v807 = vsel %vm233, %v775, -inf
      %v808 = vsel %vm233, %v776, -inf
      %v809 = vmax.f32 %v807, %v808
      %v810 = vrot.slane %v809, 4
      %v811 = vmax.f32 %v809, %v810
      %v812 = vrot.slane %v811, 2
      %v813 = vmax.f32 %v811, %v812
      %v814 = vrot.slane %v813, 1
      %v815 = vmax.f32 %v813, %v814
      %v816 = vsel %vm233, %v777, -inf
      %v817 = vsel %vm233, %v778, -inf
      %v818 = vmax.f32 %v816, %v817
      %v819 = vrot.slane %v818, 4
      %v820 = vmax.f32 %v818, %v819
      %v821 = vrot.slane %v820, 2
      %v822 = vmax.f32 %v820, %v821
      %v823 = vrot.slane %v822, 1
      %v824 = vmax.f32 %v822, %v823
      %v825 = vsel %vm233, %v779, -inf
      %v826 = vsel %vm233, %v780, -inf
      %v827 = vmax.f32 %v825, %v826
      %v828 = vrot.slane %v827, 4
      %v829 = vmax.f32 %v827, %v828
      %v830 = vrot.slane %v829, 2
      %v831 = vmax.f32 %v829, %v830
      %v832 = vrot.slane %v831, 1
      %v833 = vmax.f32 %v831, %v832
      %v834 = vsel %vm233, %v781, -inf
      %v835 = vsel %vm233, %v782, -inf
      %v836 = vmax.f32 %v834, %v835
      %v837 = vrot.slane %v836, 4
      %v838 = vmax.f32 %v836, %v837
      %v839 = vrot.slane %v838, 2
      %v840 = vmax.f32 %v838, %v839
      %v841 = vrot.slane %v840, 1
      %v842 = vmax.f32 %v840, %v841
      %v843 = vsel %vm233, %v783, -inf
      %v844 = vsel %vm233, %v784, -inf
      %v845 = vmax.f32 %v843, %v844
      %v846 = vrot.slane %v845, 4
      %v847 = vmax.f32 %v845, %v846
      %v848 = vrot.slane %v847, 2
      %v849 = vmax.f32 %v847, %v848
      %v850 = vrot.slane %v849, 1
      %v851 = vmax.f32 %v849, %v850
      %v852 = vsel %vm233, %v785, -inf
      %v853 = vsel %vm233, %v786, -inf
      %v854 = vmax.f32 %v852, %v853
      %v855 = vrot.slane %v854, 4
      %v856 = vmax.f32 %v854, %v855
      %v857 = vrot.slane %v856, 2
      %v858 = vmax.f32 %v856, %v857
      %v859 = vrot.slane %v858, 1
      %v860 = vmax.f32 %v858, %v859
      %v861 = vsel %vm233, %v787, -inf
      %v862 = vsel %vm233, %v788, -inf
      %v863 = vmax.f32 %v861, %v862
      %v864 = vrot.slane %v863, 4
      %v865 = vmax.f32 %v863, %v864
      %v866 = vrot.slane %v865, 2
      %v867 = vmax.f32 %v865, %v866
      %v868 = vrot.slane %v867, 1
      %v869 = vmax.f32 %v867, %v868
      %v870 = vsel %vm233, %v789, -inf
      %v871 = vsel %vm233, %v790, -inf
      %v872 = vmax.f32 %v870, %v871
      %v873 = vrot.slane %v872, 4
      %v874 = vmax.f32 %v872, %v873
      %v875 = vrot.slane %v874, 2
      %v876 = vmax.f32 %v874, %v875
      %v877 = vrot.slane %v876, 1
      %v878 = vmax.f32 %v876, %v877
      %v879 = vsel %vm233, %v791, -inf
      %v880 = vsel %vm233, %v792, -inf
      %v881 = vmax.f32 %v879, %v880
      %v882 = vrot.slane %v881, 4
      %v883 = vmax.f32 %v881, %v882
      %v884 = vrot.slane %v883, 2
      %v885 = vmax.f32 %v883, %v884
      %v886 = vrot.slane %v885, 1
      %v887 = vmax.f32 %v885, %v886
      %v888 = vsel %vm233, %v793, -inf
      %v889 = vsel %vm233, %v794, -inf
      %v890 = vmax.f32 %v888, %v889
      %v891 = vrot.slane %v890, 4
      %v892 = vmax.f32 %v890, %v891
      %v893 = vrot.slane %v892, 2
      %v894 = vmax.f32 %v892, %v893
      %v895 = vrot.slane %v894, 1
      %v896 = vmax.f32 %v894, %v895
      %v897 = vsel %vm233, %v795, -inf
      %v898 = vsel %vm233, %v796, -inf
      %v899 = vmax.f32 %v897, %v898
      %v900 = vrot.slane %v899, 4
      %v901 = vmax.f32 %v899, %v900
      %v902 = vrot.slane %v901, 2
      %v903 = vmax.f32 %v901, %v902
      %v904 = vrot.slane %v903, 1
      %v905 = vmax.f32 %v903, %v904
      %v906 = vsel %vm233, %v797, -inf
      %v907 = vsel %vm233, %v798, -inf
      %v908 = vmax.f32 %v906, %v907
      %v909 = vrot.slane %v908, 4
      %v910 = vmax.f32 %v908, %v909
      %v911 = vrot.slane %v910, 2
      %v912 = vmax.f32 %v910, %v911
      %v913 = vrot.slane %v912, 1
      %v914 = vmax.f32 %v912, %v913
      %v915 = vsel %vm233, %v799, -inf
      %v916 = vsel %vm233, %v800, -inf
      %v917 = vmax.f32 %v915, %v916
      %v918 = vrot.slane %v917, 4
      %v919 = vmax.f32 %v917, %v918
      %v920 = vrot.slane %v919, 2
      %v921 = vmax.f32 %v919, %v920
      %v922 = vrot.slane %v921, 1
      %v923 = vmax.f32 %v921, %v922
      %v924 = vsel %vm233, %v801, -inf
      %v925 = vsel %vm233, %v802, -inf
      %v926 = vmax.f32 %v924, %v925
      %v927 = vrot.slane %v926, 4
      %v928 = vmax.f32 %v926, %v927
      %v929 = vrot.slane %v928, 2
      %v930 = vmax.f32 %v928, %v929
      %v931 = vrot.slane %v930, 1
      %v932 = vmax.f32 %v930, %v931
      %v933 = vsel %vm233, %v803, -inf
      %v934 = vsel %vm233, %v804, -inf
      %v935 = vmax.f32 %v933, %v934
      %v936 = vrot.slane %v935, 4
      %v937 = vmax.f32 %v935, %v936
      %v938 = vrot.slane %v937, 2
      %v939 = vmax.f32 %v937, %v938
      %v940 = vrot.slane %v939, 1
      %v941 = vmax.f32 %v939, %v940
      %v942 = vsel %vm233, %v805, -inf
      %v943 = vsel %vm233, %v806, -inf
      %v944 = vmax.f32 %v942, %v943
      %v945 = vrot.slane %v944, 4
      %v946 = vmax.f32 %v944, %v945
      %v947 = vrot.slane %v946, 2
      %v948 = vmax.f32 %v946, %v947
      %v949 = vrot.slane %v948, 1
      %v950 = vmax.f32 %v948, %v949
      %s951 = sadd.s32 %s186, 4
      %s952 = sld [smem:[#allocation6 + %s951]]
      %s953 = sld [smem:[#allocation7 + %s951]]
      %v954 = vstv %s952
      %vm955 = vcmp.ge.s32.totalorder %v184, %v954
      %vm956 = vcmp.ge.s32.totalorder %v185, %v954
      %v957 = vstv %s953
      %vm958 = vcmp.lt.s32.totalorder %v184, %v957
      %vm959 = vcmp.lt.s32.totalorder %v185, %v957
      %vm960 = vmand %vm955, %vm958
      %vm961 = vmand %vm956, %vm959
      %v962 = vsel %vm960, 1, 0
      %v963 = vsel %vm961, 1, 0
      %vm964 = vcmp.eq.s32.totalorder %v962, 1
      %vm965 = vcmp.eq.s32.totalorder %v963, 1
      %v966 = vsel %vm964, %v151, -3.4028235e+38
      %v967 = vsel %vm965, %v152, -3.4028235e+38
      %v968 = vsel %vm964, %v153, -3.4028235e+38
      %v969 = vsel %vm965, %v154, -3.4028235e+38
      %v970 = vsel %vm964, %v155, -3.4028235e+38
      %v971 = vsel %vm965, %v156, -3.4028235e+38
      %v972 = vsel %vm964, %v157, -3.4028235e+38
      %v973 = vsel %vm965, %v158, -3.4028235e+38
      %v974 = vsel %vm964, %v159, -3.4028235e+38
      %v975 = vsel %vm965, %v160, -3.4028235e+38
      %v976 = vsel %vm964, %v161, -3.4028235e+38
      %v977 = vsel %vm965, %v162, -3.4028235e+38
      %v978 = vsel %vm964, %v163, -3.4028235e+38
      %v979 = vsel %vm965, %v164, -3.4028235e+38
      %v980 = vsel %vm964, %v165, -3.4028235e+38
      %v981 = vsel %vm965, %v166, -3.4028235e+38
      %v982 = vsel %vm964, %v167, -3.4028235e+38
      %v983 = vsel %vm965, %v168, -3.4028235e+38
      %v984 = vsel %vm964, %v169, -3.4028235e+38
      %v985 = vsel %vm965, %v170, -3.4028235e+38
      %v986 = vsel %vm964, %v171, -3.4028235e+38
      %v987 = vsel %vm965, %v172, -3.4028235e+38
      %v988 = vsel %vm964, %v173, -3.4028235e+38
      %v989 = vsel %vm965, %v174, -3.4028235e+38
      %v990 = vsel %vm964, %v175, -3.4028235e+38
      %v991 = vsel %vm965, %v176, -3.4028235e+38
      %v992 = vsel %vm964, %v177, -3.4028235e+38
      %v993 = vsel %vm965, %v178, -3.4028235e+38
      %v994 = vsel %vm964, %v179, -3.4028235e+38
      %v995 = vsel %vm965, %v180, -3.4028235e+38
      %v996 = vsel %vm964, %v181, -3.4028235e+38
      %v997 = vsel %vm965, %v182, -3.4028235e+38
      %v998 = vsel %vm233, %v966, -inf
      %v999 = vsel %vm233, %v967, -inf
      %v1000 = vmax.f32 %v998, %v999
      %v1001 = vrot.slane %v1000, 4
      %v1002 = vmax.f32 %v1000, %v1001
      %v1003 = vrot.slane %v1002, 2
      %v1004 = vmax.f32 %v1002, %v1003
      %v1005 = vrot.slane %v1004, 1
      %v1006 = vmax.f32 %v1004, %v1005
      %v1007 = vsel %vm233, %v968, -inf
      %v1008 = vsel %vm233, %v969, -inf
      %v1009 = vmax.f32 %v1007, %v1008
      %v1010 = vrot.slane %v1009, 4
      %v1011 = vmax.f32 %v1009, %v1010
      %v1012 = vrot.slane %v1011, 2
      %v1013 = vmax.f32 %v1011, %v1012
      %v1014 = vrot.slane %v1013, 1
      %v1015 = vmax.f32 %v1013, %v1014
      %v1016 = vsel %vm233, %v970, -inf
      %v1017 = vsel %vm233, %v971, -inf
      %v1018 = vmax.f32 %v1016, %v1017
      %v1019 = vrot.slane %v1018, 4
      %v1020 = vmax.f32 %v1018, %v1019
      %v1021 = vrot.slane %v1020, 2
      %v1022 = vmax.f32 %v1020, %v1021
      %v1023 = vrot.slane %v1022, 1
      %v1024 = vmax.f32 %v1022, %v1023
      %v1025 = vsel %vm233, %v972, -inf
      %v1026 = vsel %vm233, %v973, -inf
      %v1027 = vmax.f32 %v1025, %v1026
      %v1028 = vrot.slane %v1027, 4
      %v1029 = vmax.f32 %v1027, %v1028
      %v1030 = vrot.slane %v1029, 2
      %v1031 = vmax.f32 %v1029, %v1030
      %v1032 = vrot.slane %v1031, 1
      %v1033 = vmax.f32 %v1031, %v1032
      %v1034 = vsel %vm233, %v974, -inf
      %v1035 = vsel %vm233, %v975, -inf
      %v1036 = vmax.f32 %v1034, %v1035
      %v1037 = vrot.slane %v1036, 4
      %v1038 = vmax.f32 %v1036, %v1037
      %v1039 = vrot.slane %v1038, 2
      %v1040 = vmax.f32 %v1038, %v1039
      %v1041 = vrot.slane %v1040, 1
      %v1042 = vmax.f32 %v1040, %v1041
      %v1043 = vsel %vm233, %v976, -inf
      %v1044 = vsel %vm233, %v977, -inf
      %v1045 = vmax.f32 %v1043, %v1044
      %v1046 = vrot.slane %v1045, 4
      %v1047 = vmax.f32 %v1045, %v1046
      %v1048 = vrot.slane %v1047, 2
      %v1049 = vmax.f32 %v1047, %v1048
      %v1050 = vrot.slane %v1049, 1
      %v1051 = vmax.f32 %v1049, %v1050
      %v1052 = vsel %vm233, %v978, -inf
      %v1053 = vsel %vm233, %v979, -inf
      %v1054 = vmax.f32 %v1052, %v1053
      %v1055 = vrot.slane %v1054, 4
      %v1056 = vmax.f32 %v1054, %v1055
      %v1057 = vrot.slane %v1056, 2
      %v1058 = vmax.f32 %v1056, %v1057
      %v1059 = vrot.slane %v1058, 1
      %v1060 = vmax.f32 %v1058, %v1059
      %v1061 = vsel %vm233, %v980, -inf
      %v1062 = vsel %vm233, %v981, -inf
      %v1063 = vmax.f32 %v1061, %v1062
      %v1064 = vrot.slane %v1063, 4
      %v1065 = vmax.f32 %v1063, %v1064
      %v1066 = vrot.slane %v1065, 2
      %v1067 = vmax.f32 %v1065, %v1066
      %v1068 = vrot.slane %v1067, 1
      %v1069 = vmax.f32 %v1067, %v1068
      %v1070 = vsel %vm233, %v982, -inf
      %v1071 = vsel %vm233, %v983, -inf
      %v1072 = vmax.f32 %v1070, %v1071
      %v1073 = vrot.slane %v1072, 4
      %v1074 = vmax.f32 %v1072, %v1073
      %v1075 = vrot.slane %v1074, 2
      %v1076 = vmax.f32 %v1074, %v1075
      %v1077 = vrot.slane %v1076, 1
      %v1078 = vmax.f32 %v1076, %v1077
      %v1079 = vsel %vm233, %v984, -inf
      %v1080 = vsel %vm233, %v985, -inf
      %v1081 = vmax.f32 %v1079, %v1080
      %v1082 = vrot.slane %v1081, 4
      %v1083 = vmax.f32 %v1081, %v1082
      %v1084 = vrot.slane %v1083, 2
      %v1085 = vmax.f32 %v1083, %v1084
      %v1086 = vrot.slane %v1085, 1
      %v1087 = vmax.f32 %v1085, %v1086
      %v1088 = vsel %vm233, %v986, -inf
      %v1089 = vsel %vm233, %v987, -inf
      %v1090 = vmax.f32 %v1088, %v1089
      %v1091 = vrot.slane %v1090, 4
      %v1092 = vmax.f32 %v1090, %v1091
      %v1093 = vrot.slane %v1092, 2
      %v1094 = vmax.f32 %v1092, %v1093
      %v1095 = vrot.slane %v1094, 1
      %v1096 = vmax.f32 %v1094, %v1095
      %v1097 = vsel %vm233, %v988, -inf
      %v1098 = vsel %vm233, %v989, -inf
      %v1099 = vmax.f32 %v1097, %v1098
      %v1100 = vrot.slane %v1099, 4
      %v1101 = vmax.f32 %v1099, %v1100
      %v1102 = vrot.slane %v1101, 2
      %v1103 = vmax.f32 %v1101, %v1102
      %v1104 = vrot.slane %v1103, 1
      %v1105 = vmax.f32 %v1103, %v1104
      %v1106 = vsel %vm233, %v990, -inf
      %v1107 = vsel %vm233, %v991, -inf
      %v1108 = vmax.f32 %v1106, %v1107
      %v1109 = vrot.slane %v1108, 4
      %v1110 = vmax.f32 %v1108, %v1109
      %v1111 = vrot.slane %v1110, 2
      %v1112 = vmax.f32 %v1110, %v1111
      %v1113 = vrot.slane %v1112, 1
      %v1114 = vmax.f32 %v1112, %v1113
      %v1115 = vsel %vm233, %v992, -inf
      %v1116 = vsel %vm233, %v993, -inf
      %v1117 = vmax.f32 %v1115, %v1116
      %v1118 = vrot.slane %v1117, 4
      %v1119 = vmax.f32 %v1117, %v1118
      %v1120 = vrot.slane %v1119, 2
      %v1121 = vmax.f32 %v1119, %v1120
      %v1122 = vrot.slane %v1121, 1
      %v1123 = vmax.f32 %v1121, %v1122
      %v1124 = vsel %vm233, %v994, -inf
      %v1125 = vsel %vm233, %v995, -inf
      %v1126 = vmax.f32 %v1124, %v1125
      %v1127 = vrot.slane %v1126, 4
      %v1128 = vmax.f32 %v1126, %v1127
      %v1129 = vrot.slane %v1128, 2
      %v1130 = vmax.f32 %v1128, %v1129
      %v1131 = vrot.slane %v1130, 1
      %v1132 = vmax.f32 %v1130, %v1131
      %v1133 = vsel %vm233, %v996, -inf
      %v1134 = vsel %vm233, %v997, -inf
      %v1135 = vmax.f32 %v1133, %v1134
      %v1136 = vrot.slane %v1135, 4
      %v1137 = vmax.f32 %v1135, %v1136
      %v1138 = vrot.slane %v1137, 2
      %v1139 = vmax.f32 %v1137, %v1138
      %v1140 = vrot.slane %v1139, 1
      %v1141 = vmax.f32 %v1139, %v1140
      %s1142 = sadd.s32 %s186, 5
      %s1143 = sld [smem:[#allocation6 + %s1142]]
      %s1144 = sld [smem:[#allocation7 + %s1142]]
      %v1145 = vstv %s1143
      %vm1146 = vcmp.ge.s32.totalorder %v184, %v1145
      %vm1147 = vcmp.ge.s32.totalorder %v185, %v1145
      %v1148 = vstv %s1144
      %vm1149 = vcmp.lt.s32.totalorder %v184, %v1148
      %vm1150 = vcmp.lt.s32.totalorder %v185, %v1148
      %vm1151 = vmand %vm1146, %vm1149
      %vm1152 = vmand %vm1147, %vm1150
      %v1153 = vsel %vm1151, 1, 0
      %v1154 = vsel %vm1152, 1, 0
      %vm1155 = vcmp.eq.s32.totalorder %v1153, 1
      %vm1156 = vcmp.eq.s32.totalorder %v1154, 1
      %v1157 = vsel %vm1155, %v151, -3.4028235e+38
      %v1158 = vsel %vm1156, %v152, -3.4028235e+38
      %v1159 = vsel %vm1155, %v153, -3.4028235e+38
      %v1160 = vsel %vm1156, %v154, -3.4028235e+38
      %v1161 = vsel %vm1155, %v155, -3.4028235e+38
      %v1162 = vsel %vm1156, %v156, -3.4028235e+38
      %v1163 = vsel %vm1155, %v157, -3.4028235e+38
      %v1164 = vsel %vm1156, %v158, -3.4028235e+38
      %v1165 = vsel %vm1155, %v159, -3.4028235e+38
      %v1166 = vsel %vm1156, %v160, -3.4028235e+38
      %v1167 = vsel %vm1155, %v161, -3.4028235e+38
      %v1168 = vsel %vm1156, %v162, -3.4028235e+38
      %v1169 = vsel %vm1155, %v163, -3.4028235e+38
      %v1170 = vsel %vm1156, %v164, -3.4028235e+38
      %v1171 = vsel %vm1155, %v165, -3.4028235e+38
      %v1172 = vsel %vm1156, %v166, -3.4028235e+38
      %v1173 = vsel %vm1155, %v167, -3.4028235e+38
      %v1174 = vsel %vm1156, %v168, -3.4028235e+38
      %v1175 = vsel %vm1155, %v169, -3.4028235e+38
      %v1176 = vsel %vm1156, %v170, -3.4028235e+38
      %v1177 = vsel %vm1155, %v171, -3.4028235e+38
      %v1178 = vsel %vm1156, %v172, -3.4028235e+38
      %v1179 = vsel %vm1155, %v173, -3.4028235e+38
      %v1180 = vsel %vm1156, %v174, -3.4028235e+38
      %v1181 = vsel %vm1155, %v175, -3.4028235e+38
      %v1182 = vsel %vm1156, %v176, -3.4028235e+38
      %v1183 = vsel %vm1155, %v177, -3.4028235e+38
      %v1184 = vsel %vm1156, %v178, -3.4028235e+38
      %v1185 = vsel %vm1155, %v179, -3.4028235e+38
      %v1186 = vsel %vm1156, %v180, -3.4028235e+38
      %v1187 = vsel %vm1155, %v181, -3.4028235e+38
      %v1188 = vsel %vm1156, %v182, -3.4028235e+38
      %v1189 = vsel %vm233, %v1157, -inf
      %v1190 = vsel %vm233, %v1158, -inf
      %v1191 = vmax.f32 %v1189, %v1190
      %v1192 = vrot.slane %v1191, 4
      %v1193 = vmax.f32 %v1191, %v1192
      %v1194 = vrot.slane %v1193, 2
      %v1195 = vmax.f32 %v1193, %v1194
      %v1196 = vrot.slane %v1195, 1
      %v1197 = vmax.f32 %v1195, %v1196
      %v1198 = vsel %vm233, %v1159, -inf
      %v1199 = vsel %vm233, %v1160, -inf
      %v1200 = vmax.f32 %v1198, %v1199
      %v1201 = vrot.slane %v1200, 4
      %v1202 = vmax.f32 %v1200, %v1201
      %v1203 = vrot.slane %v1202, 2
      %v1204 = vmax.f32 %v1202, %v1203
      %v1205 = vrot.slane %v1204, 1
      %v1206 = vmax.f32 %v1204, %v1205
      %v1207 = vsel %vm233, %v1161, -inf
      %v1208 = vsel %vm233, %v1162, -inf
      %v1209 = vmax.f32 %v1207, %v1208
      %v1210 = vrot.slane %v1209, 4
      %v1211 = vmax.f32 %v1209, %v1210
      %v1212 = vrot.slane %v1211, 2
      %v1213 = vmax.f32 %v1211, %v1212
      %v1214 = vrot.slane %v1213, 1
      %v1215 = vmax.f32 %v1213, %v1214
      %v1216 = vsel %vm233, %v1163, -inf
      %v1217 = vsel %vm233, %v1164, -inf
      %v1218 = vmax.f32 %v1216, %v1217
      %v1219 = vrot.slane %v1218, 4
      %v1220 = vmax.f32 %v1218, %v1219
      %v1221 = vrot.slane %v1220, 2
      %v1222 = vmax.f32 %v1220, %v1221
      %v1223 = vrot.slane %v1222, 1
      %v1224 = vmax.f32 %v1222, %v1223
      %v1225 = vsel %vm233, %v1165, -inf
      %v1226 = vsel %vm233, %v1166, -inf
      %v1227 = vmax.f32 %v1225, %v1226
      %v1228 = vrot.slane %v1227, 4
      %v1229 = vmax.f32 %v1227, %v1228
      %v1230 = vrot.slane %v1229, 2
      %v1231 = vmax.f32 %v1229, %v1230
      %v1232 = vrot.slane %v1231, 1
      %v1233 = vmax.f32 %v1231, %v1232
      %v1234 = vsel %vm233, %v1167, -inf
      %v1235 = vsel %vm233, %v1168, -inf
      %v1236 = vmax.f32 %v1234, %v1235
      %v1237 = vrot.slane %v1236, 4
      %v1238 = vmax.f32 %v1236, %v1237
      %v1239 = vrot.slane %v1238, 2
      %v1240 = vmax.f32 %v1238, %v1239
      %v1241 = vrot.slane %v1240, 1
      %v1242 = vmax.f32 %v1240, %v1241
      %v1243 = vsel %vm233, %v1169, -inf
      %v1244 = vsel %vm233, %v1170, -inf
      %v1245 = vmax.f32 %v1243, %v1244
      %v1246 = vrot.slane %v1245, 4
      %v1247 = vmax.f32 %v1245, %v1246
      %v1248 = vrot.slane %v1247, 2
      %v1249 = vmax.f32 %v1247, %v1248
      %v1250 = vrot.slane %v1249, 1
      %v1251 = vmax.f32 %v1249, %v1250
      %v1252 = vsel %vm233, %v1171, -inf
      %v1253 = vsel %vm233, %v1172, -inf
      %v1254 = vmax.f32 %v1252, %v1253
      %v1255 = vrot.slane %v1254, 4
      %v1256 = vmax.f32 %v1254, %v1255
      %v1257 = vrot.slane %v1256, 2
      %v1258 = vmax.f32 %v1256, %v1257
      %v1259 = vrot.slane %v1258, 1
      %v1260 = vmax.f32 %v1258, %v1259
      %v1261 = vsel %vm233, %v1173, -inf
      %v1262 = vsel %vm233, %v1174, -inf
      %v1263 = vmax.f32 %v1261, %v1262
      %v1264 = vrot.slane %v1263, 4
      %v1265 = vmax.f32 %v1263, %v1264
      %v1266 = vrot.slane %v1265, 2
      %v1267 = vmax.f32 %v1265, %v1266
      %v1268 = vrot.slane %v1267, 1
      %v1269 = vmax.f32 %v1267, %v1268
      %v1270 = vsel %vm233, %v1175, -inf
      %v1271 = vsel %vm233, %v1176, -inf
      %v1272 = vmax.f32 %v1270, %v1271
      %v1273 = vrot.slane %v1272, 4
      %v1274 = vmax.f32 %v1272, %v1273
      %v1275 = vrot.slane %v1274, 2
      %v1276 = vmax.f32 %v1274, %v1275
      %v1277 = vrot.slane %v1276, 1
      %v1278 = vmax.f32 %v1276, %v1277
      %v1279 = vsel %vm233, %v1177, -inf
      %v1280 = vsel %vm233, %v1178, -inf
      %v1281 = vmax.f32 %v1279, %v1280
      %v1282 = vrot.slane %v1281, 4
      %v1283 = vmax.f32 %v1281, %v1282
      %v1284 = vrot.slane %v1283, 2
      %v1285 = vmax.f32 %v1283, %v1284
      %v1286 = vrot.slane %v1285, 1
      %v1287 = vmax.f32 %v1285, %v1286
      %v1288 = vsel %vm233, %v1179, -inf
      %v1289 = vsel %vm233, %v1180, -inf
      %v1290 = vmax.f32 %v1288, %v1289
      %v1291 = vrot.slane %v1290, 4
      %v1292 = vmax.f32 %v1290, %v1291
      %v1293 = vrot.slane %v1292, 2
      %v1294 = vmax.f32 %v1292, %v1293
      %v1295 = vrot.slane %v1294, 1
      %v1296 = vmax.f32 %v1294, %v1295
      %v1297 = vsel %vm233, %v1181, -inf
      %v1298 = vsel %vm233, %v1182, -inf
      %v1299 = vmax.f32 %v1297, %v1298
      %v1300 = vrot.slane %v1299, 4
      %v1301 = vmax.f32 %v1299, %v1300
      %v1302 = vrot.slane %v1301, 2
      %v1303 = vmax.f32 %v1301, %v1302
      %v1304 = vrot.slane %v1303, 1
      %v1305 = vmax.f32 %v1303, %v1304
      %v1306 = vsel %vm233, %v1183, -inf
      %v1307 = vsel %vm233, %v1184, -inf
      %v1308 = vmax.f32 %v1306, %v1307
      %v1309 = vrot.slane %v1308, 4
      %v1310 = vmax.f32 %v1308, %v1309
      %v1311 = vrot.slane %v1310, 2
      %v1312 = vmax.f32 %v1310, %v1311
      %v1313 = vrot.slane %v1312, 1
      %v1314 = vmax.f32 %v1312, %v1313
      %v1315 = vsel %vm233, %v1185, -inf
      %v1316 = vsel %vm233, %v1186, -inf
      %v1317 = vmax.f32 %v1315, %v1316
      %v1318 = vrot.slane %v1317, 4
      %v1319 = vmax.f32 %v1317, %v1318
      %v1320 = vrot.slane %v1319, 2
      %v1321 = vmax.f32 %v1319, %v1320
      %v1322 = vrot.slane %v1321, 1
      %v1323 = vmax.f32 %v1321, %v1322
      %v1324 = vsel %vm233, %v1187, -inf
      %v1325 = vsel %vm233, %v1188, -inf
      %v1326 = vmax.f32 %v1324, %v1325
      %v1327 = vrot.slane %v1326, 4
      %v1328 = vmax.f32 %v1326, %v1327
      %v1329 = vrot.slane %v1328, 2
      %v1330 = vmax.f32 %v1328, %v1329
      %v1331 = vrot.slane %v1330, 1
      %v1332 = vmax.f32 %v1330, %v1331
      %s1333 = sadd.s32 %s186, 6
      %s1334 = sld [smem:[#allocation6 + %s1333]]
      %s1335 = sld [smem:[#allocation7 + %s1333]]
      %v1336 = vstv %s1334
      %vm1337 = vcmp.ge.s32.totalorder %v184, %v1336
      %vm1338 = vcmp.ge.s32.totalorder %v185, %v1336
      %v1339 = vstv %s1335
      %vm1340 = vcmp.lt.s32.totalorder %v184, %v1339
      %vm1341 = vcmp.lt.s32.totalorder %v185, %v1339
      %vm1342 = vmand %vm1337, %vm1340
      %vm1343 = vmand %vm1338, %vm1341
      %v1344 = vsel %vm1342, 1, 0
      %v1345 = vsel %vm1343, 1, 0
      %vm1346 = vcmp.eq.s32.totalorder %v1344, 1
      %vm1347 = vcmp.eq.s32.totalorder %v1345, 1
      %v1348 = vsel %vm1346, %v151, -3.4028235e+38
      %v1349 = vsel %vm1347, %v152, -3.4028235e+38
      %v1350 = vsel %vm1346, %v153, -3.4028235e+38
      %v1351 = vsel %vm1347, %v154, -3.4028235e+38
      %v1352 = vsel %vm1346, %v155, -3.4028235e+38
      %v1353 = vsel %vm1347, %v156, -3.4028235e+38
      %v1354 = vsel %vm1346, %v157, -3.4028235e+38
      %v1355 = vsel %vm1347, %v158, -3.4028235e+38
      %v1356 = vsel %vm1346, %v159, -3.4028235e+38
      %v1357 = vsel %vm1347, %v160, -3.4028235e+38
      %v1358 = vsel %vm1346, %v161, -3.4028235e+38
      %v1359 = vsel %vm1347, %v162, -3.4028235e+38
      %v1360 = vsel %vm1346, %v163, -3.4028235e+38
      %v1361 = vsel %vm1347, %v164, -3.4028235e+38
      %v1362 = vsel %vm1346, %v165, -3.4028235e+38
      %v1363 = vsel %vm1347, %v166, -3.4028235e+38
      %v1364 = vsel %vm1346, %v167, -3.4028235e+38
      %v1365 = vsel %vm1347, %v168, -3.4028235e+38
      %v1366 = vsel %vm1346, %v169, -3.4028235e+38
      %v1367 = vsel %vm1347, %v170, -3.4028235e+38
      %v1368 = vsel %vm1346, %v171, -3.4028235e+38
      %v1369 = vsel %vm1347, %v172, -3.4028235e+38
      %v1370 = vsel %vm1346, %v173, -3.4028235e+38
      %v1371 = vsel %vm1347, %v174, -3.4028235e+38
      %v1372 = vsel %vm1346, %v175, -3.4028235e+38
      %v1373 = vsel %vm1347, %v176, -3.4028235e+38
      %v1374 = vsel %vm1346, %v177, -3.4028235e+38
      %v1375 = vsel %vm1347, %v178, -3.4028235e+38
      %v1376 = vsel %vm1346, %v179, -3.4028235e+38
      %v1377 = vsel %vm1347, %v180, -3.4028235e+38
      %v1378 = vsel %vm1346, %v181, -3.4028235e+38
      %v1379 = vsel %vm1347, %v182, -3.4028235e+38
      %v1380 = vsel %vm233, %v1348, -inf
      %v1381 = vsel %vm233, %v1349, -inf
      %v1382 = vmax.f32 %v1380, %v1381
      %v1383 = vrot.slane %v1382, 4
      %v1384 = vmax.f32 %v1382, %v1383
      %v1385 = vrot.slane %v1384, 2
      %v1386 = vmax.f32 %v1384, %v1385
      %v1387 = vrot.slane %v1386, 1
      %v1388 = vmax.f32 %v1386, %v1387
      %v1389 = vsel %vm233, %v1350, -inf
      %v1390 = vsel %vm233, %v1351, -inf
      %v1391 = vmax.f32 %v1389, %v1390
      %v1392 = vrot.slane %v1391, 4
      %v1393 = vmax.f32 %v1391, %v1392
      %v1394 = vrot.slane %v1393, 2
      %v1395 = vmax.f32 %v1393, %v1394
      %v1396 = vrot.slane %v1395, 1
      %v1397 = vmax.f32 %v1395, %v1396
      %v1398 = vsel %vm233, %v1352, -inf
      %v1399 = vsel %vm233, %v1353, -inf
      %v1400 = vmax.f32 %v1398, %v1399
      %v1401 = vrot.slane %v1400, 4
      %v1402 = vmax.f32 %v1400, %v1401
      %v1403 = vrot.slane %v1402, 2
      %v1404 = vmax.f32 %v1402, %v1403
      %v1405 = vrot.slane %v1404, 1
      %v1406 = vmax.f32 %v1404, %v1405
      %v1407 = vsel %vm233, %v1354, -inf
      %v1408 = vsel %vm233, %v1355, -inf
      %v1409 = vmax.f32 %v1407, %v1408
      %v1410 = vrot.slane %v1409, 4
      %v1411 = vmax.f32 %v1409, %v1410
      %v1412 = vrot.slane %v1411, 2
      %v1413 = vmax.f32 %v1411, %v1412
      %v1414 = vrot.slane %v1413, 1
      %v1415 = vmax.f32 %v1413, %v1414
      %v1416 = vsel %vm233, %v1356, -inf
      %v1417 = vsel %vm233, %v1357, -inf
      %v1418 = vmax.f32 %v1416, %v1417
      %v1419 = vrot.slane %v1418, 4
      %v1420 = vmax.f32 %v1418, %v1419
      %v1421 = vrot.slane %v1420, 2
      %v1422 = vmax.f32 %v1420, %v1421
      %v1423 = vrot.slane %v1422, 1
      %v1424 = vmax.f32 %v1422, %v1423
      %v1425 = vsel %vm233, %v1358, -inf
      %v1426 = vsel %vm233, %v1359, -inf
      %v1427 = vmax.f32 %v1425, %v1426
      %v1428 = vrot.slane %v1427, 4
      %v1429 = vmax.f32 %v1427, %v1428
      %v1430 = vrot.slane %v1429, 2
      %v1431 = vmax.f32 %v1429, %v1430
      %v1432 = vrot.slane %v1431, 1
      %v1433 = vmax.f32 %v1431, %v1432
      %v1434 = vsel %vm233, %v1360, -inf
      %v1435 = vsel %vm233, %v1361, -inf
      %v1436 = vmax.f32 %v1434, %v1435
      %v1437 = vrot.slane %v1436, 4
      %v1438 = vmax.f32 %v1436, %v1437
      %v1439 = vrot.slane %v1438, 2
      %v1440 = vmax.f32 %v1438, %v1439
      %v1441 = vrot.slane %v1440, 1
      %v1442 = vmax.f32 %v1440, %v1441
      %v1443 = vsel %vm233, %v1362, -inf
      %v1444 = vsel %vm233, %v1363, -inf
      %v1445 = vmax.f32 %v1443, %v1444
      %v1446 = vrot.slane %v1445, 4
      %v1447 = vmax.f32 %v1445, %v1446
      %v1448 = vrot.slane %v1447, 2
      %v1449 = vmax.f32 %v1447, %v1448
      %v1450 = vrot.slane %v1449, 1
      %v1451 = vmax.f32 %v1449, %v1450
      %v1452 = vsel %vm233, %v1364, -inf
      %v1453 = vsel %vm233, %v1365, -inf
      %v1454 = vmax.f32 %v1452, %v1453
      %v1455 = vrot.slane %v1454, 4
      %v1456 = vmax.f32 %v1454, %v1455
      %v1457 = vrot.slane %v1456, 2
      %v1458 = vmax.f32 %v1456, %v1457
      %v1459 = vrot.slane %v1458, 1
      %v1460 = vmax.f32 %v1458, %v1459
      %v1461 = vsel %vm233, %v1366, -inf
      %v1462 = vsel %vm233, %v1367, -inf
      %v1463 = vmax.f32 %v1461, %v1462
      %v1464 = vrot.slane %v1463, 4
      %v1465 = vmax.f32 %v1463, %v1464
      %v1466 = vrot.slane %v1465, 2
      %v1467 = vmax.f32 %v1465, %v1466
      %v1468 = vrot.slane %v1467, 1
      %v1469 = vmax.f32 %v1467, %v1468
      %v1470 = vsel %vm233, %v1368, -inf
      %v1471 = vsel %vm233, %v1369, -inf
      %v1472 = vmax.f32 %v1470, %v1471
      %v1473 = vrot.slane %v1472, 4
      %v1474 = vmax.f32 %v1472, %v1473
      %v1475 = vrot.slane %v1474, 2
      %v1476 = vmax.f32 %v1474, %v1475
      %v1477 = vrot.slane %v1476, 1
      %v1478 = vmax.f32 %v1476, %v1477
      %v1479 = vsel %vm233, %v1370, -inf
      %v1480 = vsel %vm233, %v1371, -inf
      %v1481 = vmax.f32 %v1479, %v1480
      %v1482 = vrot.slane %v1481, 4
      %v1483 = vmax.f32 %v1481, %v1482
      %v1484 = vrot.slane %v1483, 2
      %v1485 = vmax.f32 %v1483, %v1484
      %v1486 = vrot.slane %v1485, 1
      %v1487 = vmax.f32 %v1485, %v1486
      %v1488 = vsel %vm233, %v1372, -inf
      %v1489 = vsel %vm233, %v1373, -inf
      %v1490 = vmax.f32 %v1488, %v1489
      %v1491 = vrot.slane %v1490, 4
      %v1492 = vmax.f32 %v1490, %v1491
      %v1493 = vrot.slane %v1492, 2
      %v1494 = vmax.f32 %v1492, %v1493
      %v1495 = vrot.slane %v1494, 1
      %v1496 = vmax.f32 %v1494, %v1495
      %v1497 = vsel %vm233, %v1374, -inf
      %v1498 = vsel %vm233, %v1375, -inf
      %v1499 = vmax.f32 %v1497, %v1498
      %v1500 = vrot.slane %v1499, 4
      %v1501 = vmax.f32 %v1499, %v1500
      %v1502 = vrot.slane %v1501, 2
      %v1503 = vmax.f32 %v1501, %v1502
      %v1504 = vrot.slane %v1503, 1
      %v1505 = vmax.f32 %v1503, %v1504
      %v1506 = vsel %vm233, %v1376, -inf
      %v1507 = vsel %vm233, %v1377, -inf
      %v1508 = vmax.f32 %v1506, %v1507
      %v1509 = vrot.slane %v1508, 4
      %v1510 = vmax.f32 %v1508, %v1509
      %v1511 = vrot.slane %v1510, 2
      %v1512 = vmax.f32 %v1510, %v1511
      %v1513 = vrot.slane %v1512, 1
      %v1514 = vmax.f32 %v1512, %v1513
      %v1515 = vsel %vm233, %v1378, -inf
      %v1516 = vsel %vm233, %v1379, -inf
      %v1517 = vmax.f32 %v1515, %v1516
      %v1518 = vrot.slane %v1517, 4
      %v1519 = vmax.f32 %v1517, %v1518
      %v1520 = vrot.slane %v1519, 2
      %v1521 = vmax.f32 %v1519, %v1520
      %v1522 = vrot.slane %v1521, 1
      %v1523 = vmax.f32 %v1521, %v1522
      %s1524 = sld [smem:[#allocation4 + %s186]]
      %s1525 = sld [smem:[#allocation5 + %s186]]
      %v1526 = vstv %s1524
      %vm1527 = vcmp.ge.s32.totalorder %v184, %v1526
      %vm1528 = vcmp.ge.s32.totalorder %v185, %v1526
      %v1529 = vstv %s1525
      %vm1530 = vcmp.lt.s32.totalorder %v184, %v1529
      %vm1531 = vcmp.lt.s32.totalorder %v185, %v1529
      %vm1532 = vmand %vm1527, %vm1530
      %vm1533 = vmand %vm1528, %vm1531
      %v1534 = vsel %vm1532, 1, 0
      %v1535 = vsel %vm1533, 1, 0
      %vm1536 = vcmp.eq.s32.totalorder %v1534, 1
      %vm1537 = vcmp.eq.s32.totalorder %v1535, 1
      %v1650 = vrot.slane %v251, 7
      %vm1651 = vcmask 1041409
      %v1652 = vsel %vm1651, %v1650, %v242
      %v1653 = vrot.slane %v260, 6
      %vm1654 = vcmask 1042434
      %v1655 = vsel %vm1654, %v1653, %v1652
      %v1656 = vrot.slane %v269, 5
      %vm1657 = vcmask 1043459
      %v1658 = vsel %vm1657, %v1656, %v1655
      %v1659 = vrot.slane %v278, 4
      %vm1660 = vcmask 1044484
      %v1661 = vsel %vm1660, %v1659, %v1658
      %v1662 = vrot.slane %v287, 3
      %vm1663 = vcmask 1045509
      %v1664 = vsel %vm1663, %v1662, %v1661
      %v1665 = vrot.slane %v296, 2
      %vm1666 = vcmask 1046534
      %v1667 = vsel %vm1666, %v1665, %v1664
      %v1668 = vrot.slane %v305, 1
      %vm1669 = vcmask 1047559
      %v1670 = vsel %vm1669, %v1668, %v1667
      %v1671 = vrot.slane %v323, 7
      %v1672 = vsel %vm1651, %v1671, %v314
      %v1673 = vrot.slane %v332, 6
      %v1674 = vsel %vm1654, %v1673, %v1672
      %v1675 = vrot.slane %v341, 5
      %v1676 = vsel %vm1657, %v1675, %v1674
      %v1677 = vrot.slane %v350, 4
      %v1678 = vsel %vm1660, %v1677, %v1676
      %v1679 = vrot.slane %v359, 3
      %v1680 = vsel %vm1663, %v1679, %v1678
      %v1681 = vrot.slane %v368, 2
      %v1682 = vsel %vm1666, %v1681, %v1680
      %v1683 = vrot.slane %v377, 1
      %v1684 = vsel %vm1669, %v1683, %v1682
      %v1685 = vrot.slane %v442, 7
      %v1686 = vsel %vm1651, %v1685, %v433
      %v1687 = vrot.slane %v451, 6
      %v1688 = vsel %vm1654, %v1687, %v1686
      %v1689 = vrot.slane %v460, 5
      %v1690 = vsel %vm1657, %v1689, %v1688
      %v1691 = vrot.slane %v469, 4
      %v1692 = vsel %vm1660, %v1691, %v1690
      %v1693 = vrot.slane %v478, 3
      %v1694 = vsel %vm1663, %v1693, %v1692
      %v1695 = vrot.slane %v487, 2
      %v1696 = vsel %vm1666, %v1695, %v1694
      %v1697 = vrot.slane %v496, 1
      %v1698 = vsel %vm1669, %v1697, %v1696
      %v1699 = vrot.slane %v514, 7
      %v1700 = vsel %vm1651, %v1699, %v505
      %v1701 = vrot.slane %v523, 6
      %v1702 = vsel %vm1654, %v1701, %v1700
      %v1703 = vrot.slane %v532, 5
      %v1704 = vsel %vm1657, %v1703, %v1702
      %v1705 = vrot.slane %v541, 4
      %v1706 = vsel %vm1660, %v1705, %v1704
      %v1707 = vrot.slane %v550, 3
      %v1708 = vsel %vm1663, %v1707, %v1706
      %v1709 = vrot.slane %v559, 2
      %v1710 = vsel %vm1666, %v1709, %v1708
      %v1711 = vrot.slane %v568, 1
      %v1712 = vsel %vm1669, %v1711, %v1710
      %v1713 = vrot.slane %v633, 7
      %v1714 = vsel %vm1651, %v1713, %v624
      %v1715 = vrot.slane %v642, 6
      %v1716 = vsel %vm1654, %v1715, %v1714
      %v1717 = vrot.slane %v651, 5
      %v1718 = vsel %vm1657, %v1717, %v1716
      %v1719 = vrot.slane %v660, 4
      %v1720 = vsel %vm1660, %v1719, %v1718
      %v1721 = vrot.slane %v669, 3
      %v1722 = vsel %vm1663, %v1721, %v1720
      %v1723 = vrot.slane %v678, 2
      %v1724 = vsel %vm1666, %v1723, %v1722
      %v1725 = vrot.slane %v687, 1
      %v1726 = vsel %vm1669, %v1725, %v1724
      %v1727 = vrot.slane %v705, 7
      %v1728 = vsel %vm1651, %v1727, %v696
      %v1729 = vrot.slane %v714, 6
      %v1730 = vsel %vm1654, %v1729, %v1728
      %v1731 = vrot.slane %v723, 5
      %v1732 = vsel %vm1657, %v1731, %v1730
      %v1733 = vrot.slane %v732, 4
      %v1734 = vsel %vm1660, %v1733, %v1732
      %v1735 = vrot.slane %v741, 3
      %v1736 = vsel %vm1663, %v1735, %v1734
      %v1737 = vrot.slane %v750, 2
      %v1738 = vsel %vm1666, %v1737, %v1736
      %v1739 = vrot.slane %v759, 1
      %v1740 = vsel %vm1669, %v1739, %v1738
      %v1741 = vrot.slane %v824, 7
      %v1742 = vsel %vm1651, %v1741, %v815
      %v1743 = vrot.slane %v833, 6
      %v1744 = vsel %vm1654, %v1743, %v1742
      %v1745 = vrot.slane %v842, 5
      %v1746 = vsel %vm1657, %v1745, %v1744
      %v1747 = vrot.slane %v851, 4
      %v1748 = vsel %vm1660, %v1747, %v1746
      %v1749 = vrot.slane %v860, 3
      %v1750 = vsel %vm1663, %v1749, %v1748
      %v1751 = vrot.slane %v869, 2
      %v1752 = vsel %vm1666, %v1751, %v1750
      %v1753 = vrot.slane %v878, 1
      %v1754 = vsel %vm1669, %v1753, %v1752
      %v1755 = vrot.slane %v896, 7
      %v1756 = vsel %vm1651, %v1755, %v887
      %v1757 = vrot.slane %v905, 6
      %v1758 = vsel %vm1654, %v1757, %v1756
      %v1759 = vrot.slane %v914, 5
      %v1760 = vsel %vm1657, %v1759, %v1758
      %v1761 = vrot.slane %v923, 4
      %v1762 = vsel %vm1660, %v1761, %v1760
      %v1763 = vrot.slane %v932, 3
      %v1764 = vsel %vm1663, %v1763, %v1762
      %v1765 = vrot.slane %v941, 2
      %v1766 = vsel %vm1666, %v1765, %v1764
      %v1767 = vrot.slane %v950, 1
      %v1768 = vsel %vm1669, %v1767, %v1766
      %v1769 = vrot.slane %v1015, 7
      %v1770 = vsel %vm1651, %v1769, %v1006
      %v1771 = vrot.slane %v1024, 6
      %v1772 = vsel %vm1654, %v1771, %v1770
      %v1773 = vrot.slane %v1033, 5
      %v1774 = vsel %vm1657, %v1773, %v1772
      %v1775 = vrot.slane %v1042, 4
      %v1776 = vsel %vm1660, %v1775, %v1774
      %v1777 = vrot.slane %v1051, 3
      %v1778 = vsel %vm1663, %v1777, %v1776
      %v1779 = vrot.slane %v1060, 2
      %v1780 = vsel %vm1666, %v1779, %v1778
      %v1781 = vrot.slane %v1069, 1
      %v1782 = vsel %vm1669, %v1781, %v1780
      %v1783 = vrot.slane %v1087, 7
      %v1784 = vsel %vm1651, %v1783, %v1078
      %v1785 = vrot.slane %v1096, 6
      %v1786 = vsel %vm1654, %v1785, %v1784
      %v1787 = vrot.slane %v1105, 5
      %v1788 = vsel %vm1657, %v1787, %v1786
      %v1789 = vrot.slane %v1114, 4
      %v1790 = vsel %vm1660, %v1789, %v1788
      %v1791 = vrot.slane %v1123, 3
      %v1792 = vsel %vm1663, %v1791, %v1790
      %v1793 = vrot.slane %v1132, 2
      %v1794 = vsel %vm1666, %v1793, %v1792
      %v1795 = vrot.slane %v1141, 1
      %v1796 = vsel %vm1669, %v1795, %v1794
      %v1797 = vrot.slane %v1206, 7
      %v1798 = vsel %vm1651, %v1797, %v1197
      %v1799 = vrot.slane %v1215, 6
      %v1800 = vsel %vm1654, %v1799, %v1798
      %v1801 = vrot.slane %v1224, 5
      %v1802 = vsel %vm1657, %v1801, %v1800
      %v1803 = vrot.slane %v1233, 4
      %v1804 = vsel %vm1660, %v1803, %v1802
      %v1805 = vrot.slane %v1242, 3
      %v1806 = vsel %vm1663, %v1805, %v1804
      %v1807 = vrot.slane %v1251, 2
      %v1808 = vsel %vm1666, %v1807, %v1806
      %v1809 = vrot.slane %v1260, 1
      %v1810 = vsel %vm1669, %v1809, %v1808
      %v1811 = vrot.slane %v1278, 7
      %v1812 = vsel %vm1651, %v1811, %v1269
      %v1813 = vrot.slane %v1287, 6
      %v1814 = vsel %vm1654, %v1813, %v1812
      %v1815 = vrot.slane %v1296, 5
      %v1816 = vsel %vm1657, %v1815, %v1814
      %v1817 = vrot.slane %v1305, 4
      %v1818 = vsel %vm1660, %v1817, %v1816
      %v1819 = vrot.slane %v1314, 3
      %v1820 = vsel %vm1663, %v1819, %v1818
      %v1821 = vrot.slane %v1323, 2
      %v1822 = vsel %vm1666, %v1821, %v1820
      %v1823 = vrot.slane %v1332, 1
      %v1824 = vsel %vm1669, %v1823, %v1822
      %v1825 = vrot.slane %v1397, 7
      %v1826 = vsel %vm1651, %v1825, %v1388
      %v1827 = vrot.slane %v1406, 6
      %v1828 = vsel %vm1654, %v1827, %v1826
      %v1829 = vrot.slane %v1415, 5
      %v1830 = vsel %vm1657, %v1829, %v1828
      %v1831 = vrot.slane %v1424, 4
      %v1832 = vsel %vm1660, %v1831, %v1830
      %v1833 = vrot.slane %v1433, 3
      %v1834 = vsel %vm1663, %v1833, %v1832
      %v1835 = vrot.slane %v1442, 2
      %v1836 = vsel %vm1666, %v1835, %v1834
      %v1837 = vrot.slane %v1451, 1
      %v1838 = vsel %vm1669, %v1837, %v1836
      %v1839 = vrot.slane %v1469, 7
      %v1840 = vsel %vm1651, %v1839, %v1460
      %v1841 = vrot.slane %v1478, 6
      %v1842 = vsel %vm1654, %v1841, %v1840
      %v1843 = vrot.slane %v1487, 5
      %v1844 = vsel %vm1657, %v1843, %v1842
      %v1845 = vrot.slane %v1496, 4
      %v1846 = vsel %vm1660, %v1845, %v1844
      %v1847 = vrot.slane %v1505, 3
      %v1848 = vsel %vm1663, %v1847, %v1846
      %v1849 = vrot.slane %v1514, 2
      %v1850 = vsel %vm1666, %v1849, %v1848
      %v1851 = vrot.slane %v1523, 1
      %v1852 = vsel %vm1669, %v1851, %v1850
      %v1867 = vsel %vm1536, %v1670, -3.4028235e+38
      %v1868 = vsel %vm1537, %v1684, -3.4028235e+38
      %v1869 = vsel %vm1536, %v1698, -3.4028235e+38
      %v1870 = vsel %vm1537, %v1712, -3.4028235e+38
      %v1871 = vsel %vm1536, %v1726, -3.4028235e+38
      %v1872 = vsel %vm1537, %v1740, -3.4028235e+38
      %v1873 = vsel %vm1536, %v1754, -3.4028235e+38
      %v1874 = vsel %vm1537, %v1768, -3.4028235e+38
      %v1875 = vsel %vm1536, %v1782, -3.4028235e+38
      %v1876 = vsel %vm1537, %v1796, -3.4028235e+38
      %v1877 = vsel %vm1536, %v1810, -3.4028235e+38
      %v1878 = vsel %vm1537, %v1824, -3.4028235e+38
      %v1879 = vsel %vm1536, %v1838, -3.4028235e+38
      %v1880 = vsel %vm1537, %v1852, -3.4028235e+38
      %v1881 = vsel %vm233, %v1867, -inf
      %v1882 = vsel %vm233, %v1868, -inf
      %v1883 = vmax.f32 %v1881, %v1882
      %v1884 = vrot.slane %v1883, 4
      %v1885 = vmax.f32 %v1883, %v1884
      %v1886 = vrot.slane %v1885, 2
      %v1887 = vmax.f32 %v1885, %v1886
      %v1888 = vrot.slane %v1887, 1
      %v1889 = vmax.f32 %v1887, %v1888
      %v1890 = vsel %vm233, %v1869, -inf
      %v1891 = vsel %vm233, %v1870, -inf
      %v1892 = vmax.f32 %v1890, %v1891
      %v1893 = vrot.slane %v1892, 4
      %v1894 = vmax.f32 %v1892, %v1893
      %v1895 = vrot.slane %v1894, 2
      %v1896 = vmax.f32 %v1894, %v1895
      %v1897 = vrot.slane %v1896, 1
      %v1898 = vmax.f32 %v1896, %v1897
      %v1899 = vsel %vm233, %v1871, -inf
      %v1900 = vsel %vm233, %v1872, -inf
      %v1901 = vmax.f32 %v1899, %v1900
      %v1902 = vrot.slane %v1901, 4
      %v1903 = vmax.f32 %v1901, %v1902
      %v1904 = vrot.slane %v1903, 2
      %v1905 = vmax.f32 %v1903, %v1904
      %v1906 = vrot.slane %v1905, 1
      %v1907 = vmax.f32 %v1905, %v1906
      %v1908 = vsel %vm233, %v1873, -inf
      %v1909 = vsel %vm233, %v1874, -inf
      %v1910 = vmax.f32 %v1908, %v1909
      %v1911 = vrot.slane %v1910, 4
      %v1912 = vmax.f32 %v1910, %v1911
      %v1913 = vrot.slane %v1912, 2
      %v1914 = vmax.f32 %v1912, %v1913
      %v1915 = vrot.slane %v1914, 1
      %v1916 = vmax.f32 %v1914, %v1915
      %v1917 = vsel %vm233, %v1875, -inf
      %v1918 = vsel %vm233, %v1876, -inf
      %v1919 = vmax.f32 %v1917, %v1918
      %v1920 = vrot.slane %v1919, 4
      %v1921 = vmax.f32 %v1919, %v1920
      %v1922 = vrot.slane %v1921, 2
      %v1923 = vmax.f32 %v1921, %v1922
      %v1924 = vrot.slane %v1923, 1
      %v1925 = vmax.f32 %v1923, %v1924
      %v1926 = vsel %vm233, %v1877, -inf
      %v1927 = vsel %vm233, %v1878, -inf
      %v1928 = vmax.f32 %v1926, %v1927
      %v1929 = vrot.slane %v1928, 4
      %v1930 = vmax.f32 %v1928, %v1929
      %v1931 = vrot.slane %v1930, 2
      %v1932 = vmax.f32 %v1930, %v1931
      %v1933 = vrot.slane %v1932, 1
      %v1934 = vmax.f32 %v1932, %v1933
      %v1935 = vsel %vm233, %v1879, -inf
      %v1936 = vsel %vm233, %v1880, -inf
      %v1937 = vmax.f32 %v1935, %v1936
      %v1938 = vrot.slane %v1937, 4
      %v1939 = vmax.f32 %v1937, %v1938
      %v1940 = vrot.slane %v1939, 2
      %v1941 = vmax.f32 %v1939, %v1940
      %v1942 = vrot.slane %v1941, 1
      %v1943 = vmax.f32 %v1941, %v1942
      %vm1944 = vcmp.gt.f32.partialorder %v1889, -3.4028235e+38
      %vm1945 = vcmp.gt.f32.partialorder %v1898, -3.4028235e+38
      %vm1946 = vcmp.gt.f32.partialorder %v1907, -3.4028235e+38
      %vm1947 = vcmp.gt.f32.partialorder %v1916, -3.4028235e+38
      %vm1948 = vcmp.gt.f32.partialorder %v1925, -3.4028235e+38
      %vm1949 = vcmp.gt.f32.partialorder %v1934, -3.4028235e+38
      %vm1950 = vcmp.gt.f32.partialorder %v1943, -3.4028235e+38
      %v1951 = vsel %vm1944, %v1889, 0.0
      %v1952 = vsel %vm1945, %v1898, 0.0
      %v1953 = vsel %vm1946, %v1907, 0.0
      %v1954 = vsel %vm1947, %v1916, 0.0
      %v1955 = vsel %vm1948, %v1925, 0.0
      %v1956 = vsel %vm1949, %v1934, 0.0
      %v1957 = vsel %vm1950, %v1943, 0.0
      %v1965 = vsel %vm1651, %v1952, %v1951
      %v1966 = vsel %vm1654, %v1953, %v1965
      %v1967 = vsel %vm1657, %v1954, %v1966
      %v1968 = vsel %vm1660, %v1955, %v1967
      %v1969 = vsel %vm1663, %v1956, %v1968
      %v1970 = vsel %vm1666, %v1957, %v1969
      %vm1972 = vcmask 63488
      %1973 = vst.msk [vmem:[%s150] sm:$0x7f] %vm1972, %v1970
      %s1974 = sld [smem:[#allocation4 + %s378]]
      %s1975 = sld [smem:[#allocation5 + %s378]]
      %v1976 = vstv %s1974
      %vm1977 = vcmp.ge.s32.totalorder %v184, %v1976
      %vm1978 = vcmp.ge.s32.totalorder %v185, %v1976
      %v1979 = vstv %s1975
      %vm1980 = vcmp.lt.s32.totalorder %v184, %v1979
      %vm1981 = vcmp.lt.s32.totalorder %v185, %v1979
      %vm1982 = vmand %vm1977, %vm1980
      %vm1983 = vmand %vm1978, %vm1981
      %v1984 = vsel %vm1982, 1, 0
      %v1985 = vsel %vm1983, 1, 0
      %vm1986 = vcmp.eq.s32.totalorder %v1984, 1
      %vm1987 = vcmp.eq.s32.totalorder %v1985, 1
      %v1988 = vsel %vm1986, %v1670, -3.4028235e+38
      %v1989 = vsel %vm1987, %v1684, -3.4028235e+38
      %v1990 = vsel %vm1986, %v1698, -3.4028235e+38
      %v1991 = vsel %vm1987, %v1712, -3.4028235e+38
      %v1992 = vsel %vm1986, %v1726, -3.4028235e+38
      %v1993 = vsel %vm1987, %v1740, -3.4028235e+38
      %v1994 = vsel %vm1986, %v1754, -3.4028235e+38
      %v1995 = vsel %vm1987, %v1768, -3.4028235e+38
      %v1996 = vsel %vm1986, %v1782, -3.4028235e+38
      %v1997 = vsel %vm1987, %v1796, -3.4028235e+38
      %v1998 = vsel %vm1986, %v1810, -3.4028235e+38
      %v1999 = vsel %vm1987, %v1824, -3.4028235e+38
      %v2000 = vsel %vm1986, %v1838, -3.4028235e+38
      %v2001 = vsel %vm1987, %v1852, -3.4028235e+38
      %v2002 = vsel %vm233, %v1988, -inf
      %v2003 = vsel %vm233, %v1989, -inf
      %v2004 = vmax.f32 %v2002, %v2003
      %v2005 = vrot.slane %v2004, 4
      %v2006 = vmax.f32 %v2004, %v2005
      %v2007 = vrot.slane %v2006, 2
      %v2008 = vmax.f32 %v2006, %v2007
      %v2009 = vrot.slane %v2008, 1
      %v2010 = vmax.f32 %v2008, %v2009
      %v2011 = vsel %vm233, %v1990, -inf
      %v2012 = vsel %vm233, %v1991, -inf
      %v2013 = vmax.f32 %v2011, %v2012
      %v2014 = vrot.slane %v2013, 4
      %v2015 = vmax.f32 %v2013, %v2014
      %v2016 = vrot.slane %v2015, 2
      %v2017 = vmax.f32 %v2015, %v2016
      %v2018 = vrot.slane %v2017, 1
      %v2019 = vmax.f32 %v2017, %v2018
      %v2020 = vsel %vm233, %v1992, -inf
      %v2021 = vsel %vm233, %v1993, -inf
      %v2022 = vmax.f32 %v2020, %v2021
      %v2023 = vrot.slane %v2022, 4
      %v2024 = vmax.f32 %v2022, %v2023
      %v2025 = vrot.slane %v2024, 2
      %v2026 = vmax.f32 %v2024, %v2025
      %v2027 = vrot.slane %v2026, 1
      %v2028 = vmax.f32 %v2026, %v2027
      %v2029 = vsel %vm233, %v1994, -inf
      %v2030 = vsel %vm233, %v1995, -inf
      %v2031 = vmax.f32 %v2029, %v2030
      %v2032 = vrot.slane %v2031, 4
      %v2033 = vmax.f32 %v2031, %v2032
      %v2034 = vrot.slane %v2033, 2
      %v2035 = vmax.f32 %v2033, %v2034
      %v2036 = vrot.slane %v2035, 1
      %v2037 = vmax.f32 %v2035, %v2036
      %v2038 = vsel %vm233, %v1996, -inf
      %v2039 = vsel %vm233, %v1997, -inf
      %v2040 = vmax.f32 %v2038, %v2039
      %v2041 = vrot.slane %v2040, 4
      %v2042 = vmax.f32 %v2040, %v2041
      %v2043 = vrot.slane %v2042, 2
      %v2044 = vmax.f32 %v2042, %v2043
      %v2045 = vrot.slane %v2044, 1
      %v2046 = vmax.f32 %v2044, %v2045
      %v2047 = vsel %vm233, %v1998, -inf
      %v2048 = vsel %vm233, %v1999, -inf
      %v2049 = vmax.f32 %v2047, %v2048
      %v2050 = vrot.slane %v2049, 4
      %v2051 = vmax.f32 %v2049, %v2050
      %v2052 = vrot.slane %v2051, 2
      %v2053 = vmax.f32 %v2051, %v2052
      %v2054 = vrot.slane %v2053, 1
      %v2055 = vmax.f32 %v2053, %v2054
      %v2056 = vsel %vm233, %v2000, -inf
      %v2057 = vsel %vm233, %v2001, -inf
      %v2058 = vmax.f32 %v2056, %v2057
      %v2059 = vrot.slane %v2058, 4
      %v2060 = vmax.f32 %v2058, %v2059
      %v2061 = vrot.slane %v2060, 2
      %v2062 = vmax.f32 %v2060, %v2061
      %v2063 = vrot.slane %v2062, 1
      %v2064 = vmax.f32 %v2062, %v2063
      %vm2065 = vcmp.gt.f32.partialorder %v2010, -3.4028235e+38
      %vm2066 = vcmp.gt.f32.partialorder %v2019, -3.4028235e+38
      %vm2067 = vcmp.gt.f32.partialorder %v2028, -3.4028235e+38
      %vm2068 = vcmp.gt.f32.partialorder %v2037, -3.4028235e+38
      %vm2069 = vcmp.gt.f32.partialorder %v2046, -3.4028235e+38
      %vm2070 = vcmp.gt.f32.partialorder %v2055, -3.4028235e+38
      %vm2071 = vcmp.gt.f32.partialorder %v2064, -3.4028235e+38
      %v2072 = vsel %vm2065, %v2010, 0.0
      %v2073 = vsel %vm2066, %v2019, 0.0
      %v2074 = vsel %vm2067, %v2028, 0.0
      %v2075 = vsel %vm2068, %v2037, 0.0
      %v2076 = vsel %vm2069, %v2046, 0.0
      %v2077 = vsel %vm2070, %v2055, 0.0
      %v2078 = vsel %vm2071, %v2064, 0.0
      %v2086 = vsel %vm1651, %v2073, %v2072
      %v2087 = vsel %vm1654, %v2074, %v2086
      %v2088 = vsel %vm1657, %v2075, %v2087
      %v2089 = vsel %vm1660, %v2076, %v2088
      %v2090 = vsel %vm1663, %v2077, %v2089
      %v2091 = vsel %vm1666, %v2078, %v2090
      %2093 = vst.msk [vmem:[%s150 + $0x7] sm:$0x7f] %vm1972, %v2091
      %s2094 = sld [smem:[#allocation4 + %s569]]
      %s2095 = sld [smem:[#allocation5 + %s569]]
      %v2096 = vstv %s2094
      %vm2097 = vcmp.ge.s32.totalorder %v184, %v2096
      %vm2098 = vcmp.ge.s32.totalorder %v185, %v2096
      %v2099 = vstv %s2095
      %vm2100 = vcmp.lt.s32.totalorder %v184, %v2099
      %vm2101 = vcmp.lt.s32.totalorder %v185, %v2099
      %vm2102 = vmand %vm2097, %vm2100
      %vm2103 = vmand %vm2098, %vm2101
      %v2104 = vsel %vm2102, 1, 0
      %v2105 = vsel %vm2103, 1, 0
      %vm2106 = vcmp.eq.s32.totalorder %v2104, 1
      %vm2107 = vcmp.eq.s32.totalorder %v2105, 1
      %v2108 = vsel %vm2106, %v1670, -3.4028235e+38
      %v2109 = vsel %vm2107, %v1684, -3.4028235e+38
      %v2110 = vsel %vm2106, %v1698, -3.4028235e+38
      %v2111 = vsel %vm2107, %v1712, -3.4028235e+38
      %v2112 = vsel %vm2106, %v1726, -3.4028235e+38
      %v2113 = vsel %vm2107, %v1740, -3.4028235e+38
      %v2114 = vsel %vm2106, %v1754, -3.4028235e+38
      %v2115 = vsel %vm2107, %v1768, -3.4028235e+38
      %v2116 = vsel %vm2106, %v1782, -3.4028235e+38
      %v2117 = vsel %vm2107, %v1796, -3.4028235e+38
      %v2118 = vsel %vm2106, %v1810, -3.4028235e+38
      %v2119 = vsel %vm2107, %v1824, -3.4028235e+38
      %v2120 = vsel %vm2106, %v1838, -3.4028235e+38
      %v2121 = vsel %vm2107, %v1852, -3.4028235e+38
      %v2122 = vsel %vm233, %v2108, -inf
      %v2123 = vsel %vm233, %v2109, -inf
      %v2124 = vmax.f32 %v2122, %v2123
      %v2125 = vrot.slane %v2124, 4
      %v2126 = vmax.f32 %v2124, %v2125
      %v2127 = vrot.slane %v2126, 2
      %v2128 = vmax.f32 %v2126, %v2127
      %v2129 = vrot.slane %v2128, 1
      %v2130 = vmax.f32 %v2128, %v2129
      %v2131 = vsel %vm233, %v2110, -inf
      %v2132 = vsel %vm233, %v2111, -inf
      %v2133 = vmax.f32 %v2131, %v2132
      %v2134 = vrot.slane %v2133, 4
      %v2135 = vmax.f32 %v2133, %v2134
      %v2136 = vrot.slane %v2135, 2
      %v2137 = vmax.f32 %v2135, %v2136
      %v2138 = vrot.slane %v2137, 1
      %v2139 = vmax.f32 %v2137, %v2138
      %v2140 = vsel %vm233, %v2112, -inf
      %v2141 = vsel %vm233, %v2113, -inf
      %v2142 = vmax.f32 %v2140, %v2141
      %v2143 = vrot.slane %v2142, 4
      %v2144 = vmax.f32 %v2142, %v2143
      %v2145 = vrot.slane %v2144, 2
      %v2146 = vmax.f32 %v2144, %v2145
      %v2147 = vrot.slane %v2146, 1
      %v2148 = vmax.f32 %v2146, %v2147
      %v2149 = vsel %vm233, %v2114, -inf
      %v2150 = vsel %vm233, %v2115, -inf
      %v2151 = vmax.f32 %v2149, %v2150
      %v2152 = vrot.slane %v2151, 4
      %v2153 = vmax.f32 %v2151, %v2152
      %v2154 = vrot.slane %v2153, 2
      %v2155 = vmax.f32 %v2153, %v2154
      %v2156 = vrot.slane %v2155, 1
      %v2157 = vmax.f32 %v2155, %v2156
      %v2158 = vsel %vm233, %v2116, -inf
      %v2159 = vsel %vm233, %v2117, -inf
      %v2160 = vmax.f32 %v2158, %v2159
      %v2161 = vrot.slane %v2160, 4
      %v2162 = vmax.f32 %v2160, %v2161
      %v2163 = vrot.slane %v2162, 2
      %v2164 = vmax.f32 %v2162, %v2163
      %v2165 = vrot.slane %v2164, 1
      %v2166 = vmax.f32 %v2164, %v2165
      %v2167 = vsel %vm233, %v2118, -inf
      %v2168 = vsel %vm233, %v2119, -inf
      %v2169 = vmax.f32 %v2167, %v2168
      %v2170 = vrot.slane %v2169, 4
      %v2171 = vmax.f32 %v2169, %v2170
      %v2172 = vrot.slane %v2171, 2
      %v2173 = vmax.f32 %v2171, %v2172
      %v2174 = vrot.slane %v2173, 1
      %v2175 = vmax.f32 %v2173, %v2174
      %v2176 = vsel %vm233, %v2120, -inf
      %v2177 = vsel %vm233, %v2121, -inf
      %v2178 = vmax.f32 %v2176, %v2177
      %v2179 = vrot.slane %v2178, 4
      %v2180 = vmax.f32 %v2178, %v2179
      %v2181 = vrot.slane %v2180, 2
      %v2182 = vmax.f32 %v2180, %v2181
      %v2183 = vrot.slane %v2182, 1
      %v2184 = vmax.f32 %v2182, %v2183
      %vm2185 = vcmp.gt.f32.partialorder %v2130, -3.4028235e+38
      %vm2186 = vcmp.gt.f32.partialorder %v2139, -3.4028235e+38
      %vm2187 = vcmp.gt.f32.partialorder %v2148, -3.4028235e+38
      %vm2188 = vcmp.gt.f32.partialorder %v2157, -3.4028235e+38
      %vm2189 = vcmp.gt.f32.partialorder %v2166, -3.4028235e+38
      %vm2190 = vcmp.gt.f32.partialorder %v2175, -3.4028235e+38
      %vm2191 = vcmp.gt.f32.partialorder %v2184, -3.4028235e+38
      %v2192 = vsel %vm2185, %v2130, 0.0
      %v2193 = vsel %vm2186, %v2139, 0.0
      %v2194 = vsel %vm2187, %v2148, 0.0
      %v2195 = vsel %vm2188, %v2157, 0.0
      %v2196 = vsel %vm2189, %v2166, 0.0
      %v2197 = vsel %vm2190, %v2175, 0.0
      %v2198 = vsel %vm2191, %v2184, 0.0
      %v2206 = vsel %vm1651, %v2193, %v2192
      %v2207 = vsel %vm1654, %v2194, %v2206
      %v2208 = vsel %vm1657, %v2195, %v2207
      %v2209 = vsel %vm1660, %v2196, %v2208
      %v2210 = vsel %vm1663, %v2197, %v2209
      %v2211 = vsel %vm1666, %v2198, %v2210
      %2213 = vst.msk [vmem:[%s150 + $0xe] sm:$0x7f] %vm1972, %v2211
      %s2214 = sld [smem:[#allocation4 + %s760]]
      %s2215 = sld [smem:[#allocation5 + %s760]]
      %v2216 = vstv %s2214
      %vm2217 = vcmp.ge.s32.totalorder %v184, %v2216
      %vm2218 = vcmp.ge.s32.totalorder %v185, %v2216
      %v2219 = vstv %s2215
      %vm2220 = vcmp.lt.s32.totalorder %v184, %v2219
      %vm2221 = vcmp.lt.s32.totalorder %v185, %v2219
      %vm2222 = vmand %vm2217, %vm2220
      %vm2223 = vmand %vm2218, %vm2221
      %v2224 = vsel %vm2222, 1, 0
      %v2225 = vsel %vm2223, 1, 0
      %vm2226 = vcmp.eq.s32.totalorder %v2224, 1
      %vm2227 = vcmp.eq.s32.totalorder %v2225, 1
      %v2228 = vsel %vm2226, %v1670, -3.4028235e+38
      %v2229 = vsel %vm2227, %v1684, -3.4028235e+38
      %v2230 = vsel %vm2226, %v1698, -3.4028235e+38
      %v2231 = vsel %vm2227, %v1712, -3.4028235e+38
      %v2232 = vsel %vm2226, %v1726, -3.4028235e+38
      %v2233 = vsel %vm2227, %v1740, -3.4028235e+38
      %v2234 = vsel %vm2226, %v1754, -3.4028235e+38
      %v2235 = vsel %vm2227, %v1768, -3.4028235e+38
      %v2236 = vsel %vm2226, %v1782, -3.4028235e+38
      %v2237 = vsel %vm2227, %v1796, -3.4028235e+38
      %v2238 = vsel %vm2226, %v1810, -3.4028235e+38
      %v2239 = vsel %vm2227, %v1824, -3.4028235e+38
      %v2240 = vsel %vm2226, %v1838, -3.4028235e+38
      %v2241 = vsel %vm2227, %v1852, -3.4028235e+38
      %v2242 = vsel %vm233, %v2228, -inf
      %v2243 = vsel %vm233, %v2229, -inf
      %v2244 = vmax.f32 %v2242, %v2243
      %v2245 = vrot.slane %v2244, 4
      %v2246 = vmax.f32 %v2244, %v2245
      %v2247 = vrot.slane %v2246, 2
      %v2248 = vmax.f32 %v2246, %v2247
      %v2249 = vrot.slane %v2248, 1
      %v2250 = vmax.f32 %v2248, %v2249
      %v2251 = vsel %vm233, %v2230, -inf
      %v2252 = vsel %vm233, %v2231, -inf
      %v2253 = vmax.f32 %v2251, %v2252
      %v2254 = vrot.slane %v2253, 4
      %v2255 = vmax.f32 %v2253, %v2254
      %v2256 = vrot.slane %v2255, 2
      %v2257 = vmax.f32 %v2255, %v2256
      %v2258 = vrot.slane %v2257, 1
      %v2259 = vmax.f32 %v2257, %v2258
      %v2260 = vsel %vm233, %v2232, -inf
      %v2261 = vsel %vm233, %v2233, -inf
      %v2262 = vmax.f32 %v2260, %v2261
      %v2263 = vrot.slane %v2262, 4
      %v2264 = vmax.f32 %v2262, %v2263
      %v2265 = vrot.slane %v2264, 2
      %v2266 = vmax.f32 %v2264, %v2265
      %v2267 = vrot.slane %v2266, 1
      %v2268 = vmax.f32 %v2266, %v2267
      %v2269 = vsel %vm233, %v2234, -inf
      %v2270 = vsel %vm233, %v2235, -inf
      %v2271 = vmax.f32 %v2269, %v2270
      %v2272 = vrot.slane %v2271, 4
      %v2273 = vmax.f32 %v2271, %v2272
      %v2274 = vrot.slane %v2273, 2
      %v2275 = vmax.f32 %v2273, %v2274
      %v2276 = vrot.slane %v2275, 1
      %v2277 = vmax.f32 %v2275, %v2276
      %v2278 = vsel %vm233, %v2236, -inf
      %v2279 = vsel %vm233, %v2237, -inf
      %v2280 = vmax.f32 %v2278, %v2279
      %v2281 = vrot.slane %v2280, 4
      %v2282 = vmax.f32 %v2280, %v2281
      %v2283 = vrot.slane %v2282, 2
      %v2284 = vmax.f32 %v2282, %v2283
      %v2285 = vrot.slane %v2284, 1
      %v2286 = vmax.f32 %v2284, %v2285
      %v2287 = vsel %vm233, %v2238, -inf
      %v2288 = vsel %vm233, %v2239, -inf
      %v2289 = vmax.f32 %v2287, %v2288
      %v2290 = vrot.slane %v2289, 4
      %v2291 = vmax.f32 %v2289, %v2290
      %v2292 = vrot.slane %v2291, 2
      %v2293 = vmax.f32 %v2291, %v2292
      %v2294 = vrot.slane %v2293, 1
      %v2295 = vmax.f32 %v2293, %v2294
      %v2296 = vsel %vm233, %v2240, -inf
      %v2297 = vsel %vm233, %v2241, -inf
      %v2298 = vmax.f32 %v2296, %v2297
      %v2299 = vrot.slane %v2298, 4
      %v2300 = vmax.f32 %v2298, %v2299
      %v2301 = vrot.slane %v2300, 2
      %v2302 = vmax.f32 %v2300, %v2301
      %v2303 = vrot.slane %v2302, 1
      %v2304 = vmax.f32 %v2302, %v2303
      %vm2305 = vcmp.gt.f32.partialorder %v2250, -3.4028235e+38
      %vm2306 = vcmp.gt.f32.partialorder %v2259, -3.4028235e+38
      %vm2307 = vcmp.gt.f32.partialorder %v2268, -3.4028235e+38
      %vm2308 = vcmp.gt.f32.partialorder %v2277, -3.4028235e+38
      %vm2309 = vcmp.gt.f32.partialorder %v2286, -3.4028235e+38
      %vm2310 = vcmp.gt.f32.partialorder %v2295, -3.4028235e+38
      %vm2311 = vcmp.gt.f32.partialorder %v2304, -3.4028235e+38
      %v2312 = vsel %vm2305, %v2250, 0.0
      %v2313 = vsel %vm2306, %v2259, 0.0
      %v2314 = vsel %vm2307, %v2268, 0.0
      %v2315 = vsel %vm2308, %v2277, 0.0
      %v2316 = vsel %vm2309, %v2286, 0.0
      %v2317 = vsel %vm2310, %v2295, 0.0
      %v2318 = vsel %vm2311, %v2304, 0.0
      %v2326 = vsel %vm1651, %v2313, %v2312
      %v2327 = vsel %vm1654, %v2314, %v2326
      %v2328 = vsel %vm1657, %v2315, %v2327
      %v2329 = vsel %vm1660, %v2316, %v2328
      %v2330 = vsel %vm1663, %v2317, %v2329
      %v2331 = vsel %vm1666, %v2318, %v2330
      %2333 = vst.msk [vmem:[%s150 + $0x15] sm:$0x7f] %vm1972, %v2331
      %s2334 = sld [smem:[#allocation4 + %s951]]
      %s2335 = sld [smem:[#allocation5 + %s951]]
      %v2336 = vstv %s2334
      %vm2337 = vcmp.ge.s32.totalorder %v184, %v2336
      %vm2338 = vcmp.ge.s32.totalorder %v185, %v2336
      %v2339 = vstv %s2335
      %vm2340 = vcmp.lt.s32.totalorder %v184, %v2339
      %vm2341 = vcmp.lt.s32.totalorder %v185, %v2339
      %vm2342 = vmand %vm2337, %vm2340
      %vm2343 = vmand %vm2338, %vm2341
      %v2344 = vsel %vm2342, 1, 0
      %v2345 = vsel %vm2343, 1, 0
      %vm2346 = vcmp.eq.s32.totalorder %v2344, 1
      %vm2347 = vcmp.eq.s32.totalorder %v2345, 1
      %v2348 = vsel %vm2346, %v1670, -3.4028235e+38
      %v2349 = vsel %vm2347, %v1684, -3.4028235e+38
      %v2350 = vsel %vm2346, %v1698, -3.4028235e+38
      %v2351 = vsel %vm2347, %v1712, -3.4028235e+38
      %v2352 = vsel %vm2346, %v1726, -3.4028235e+38
      %v2353 = vsel %vm2347, %v1740, -3.4028235e+38
      %v2354 = vsel %vm2346, %v1754, -3.4028235e+38
      %v2355 = vsel %vm2347, %v1768, -3.4028235e+38
      %v2356 = vsel %vm2346, %v1782, -3.4028235e+38
      %v2357 = vsel %vm2347, %v1796, -3.4028235e+38
      %v2358 = vsel %vm2346, %v1810, -3.4028235e+38
      %v2359 = vsel %vm2347, %v1824, -3.4028235e+38
      %v2360 = vsel %vm2346, %v1838, -3.4028235e+38
      %v2361 = vsel %vm2347, %v1852, -3.4028235e+38
      %v2362 = vsel %vm233, %v2348, -inf
      %v2363 = vsel %vm233, %v2349, -inf
      %v2364 = vmax.f32 %v2362, %v2363
      %v2365 = vrot.slane %v2364, 4
      %v2366 = vmax.f32 %v2364, %v2365
      %v2367 = vrot.slane %v2366, 2
      %v2368 = vmax.f32 %v2366, %v2367
      %v2369 = vrot.slane %v2368, 1
      %v2370 = vmax.f32 %v2368, %v2369
      %v2371 = vsel %vm233, %v2350, -inf
      %v2372 = vsel %vm233, %v2351, -inf
      %v2373 = vmax.f32 %v2371, %v2372
      %v2374 = vrot.slane %v2373, 4
      %v2375 = vmax.f32 %v2373, %v2374
      %v2376 = vrot.slane %v2375, 2
      %v2377 = vmax.f32 %v2375, %v2376
      %v2378 = vrot.slane %v2377, 1
      %v2379 = vmax.f32 %v2377, %v2378
      %v2380 = vsel %vm233, %v2352, -inf
      %v2381 = vsel %vm233, %v2353, -inf
      %v2382 = vmax.f32 %v2380, %v2381
      %v2383 = vrot.slane %v2382, 4
      %v2384 = vmax.f32 %v2382, %v2383
      %v2385 = vrot.slane %v2384, 2
      %v2386 = vmax.f32 %v2384, %v2385
      %v2387 = vrot.slane %v2386, 1
      %v2388 = vmax.f32 %v2386, %v2387
      %v2389 = vsel %vm233, %v2354, -inf
      %v2390 = vsel %vm233, %v2355, -inf
      %v2391 = vmax.f32 %v2389, %v2390
      %v2392 = vrot.slane %v2391, 4
      %v2393 = vmax.f32 %v2391, %v2392
      %v2394 = vrot.slane %v2393, 2
      %v2395 = vmax.f32 %v2393, %v2394
      %v2396 = vrot.slane %v2395, 1
      %v2397 = vmax.f32 %v2395, %v2396
      %v2398 = vsel %vm233, %v2356, -inf
      %v2399 = vsel %vm233, %v2357, -inf
      %v2400 = vmax.f32 %v2398, %v2399
      %v2401 = vrot.slane %v2400, 4
      %v2402 = vmax.f32 %v2400, %v2401
      %v2403 = vrot.slane %v2402, 2
      %v2404 = vmax.f32 %v2402, %v2403
      %v2405 = vrot.slane %v2404, 1
      %v2406 = vmax.f32 %v2404, %v2405
      %v2407 = vsel %vm233, %v2358, -inf
      %v2408 = vsel %vm233, %v2359, -inf
      %v2409 = vmax.f32 %v2407, %v2408
      %v2410 = vrot.slane %v2409, 4
      %v2411 = vmax.f32 %v2409, %v2410
      %v2412 = vrot.slane %v2411, 2
      %v2413 = vmax.f32 %v2411, %v2412
      %v2414 = vrot.slane %v2413, 1
      %v2415 = vmax.f32 %v2413, %v2414
      %v2416 = vsel %vm233, %v2360, -inf
      %v2417 = vsel %vm233, %v2361, -inf
      %v2418 = vmax.f32 %v2416, %v2417
      %v2419 = vrot.slane %v2418, 4
      %v2420 = vmax.f32 %v2418, %v2419
      %v2421 = vrot.slane %v2420, 2
      %v2422 = vmax.f32 %v2420, %v2421
      %v2423 = vrot.slane %v2422, 1
      %v2424 = vmax.f32 %v2422, %v2423
      %vm2425 = vcmp.gt.f32.partialorder %v2370, -3.4028235e+38
      %vm2426 = vcmp.gt.f32.partialorder %v2379, -3.4028235e+38
      %vm2427 = vcmp.gt.f32.partialorder %v2388, -3.4028235e+38
      %vm2428 = vcmp.gt.f32.partialorder %v2397, -3.4028235e+38
      %vm2429 = vcmp.gt.f32.partialorder %v2406, -3.4028235e+38
      %vm2430 = vcmp.gt.f32.partialorder %v2415, -3.4028235e+38
      %vm2431 = vcmp.gt.f32.partialorder %v2424, -3.4028235e+38
      %v2432 = vsel %vm2425, %v2370, 0.0
      %v2433 = vsel %vm2426, %v2379, 0.0
      %v2434 = vsel %vm2427, %v2388, 0.0
      %v2435 = vsel %vm2428, %v2397, 0.0
      %v2436 = vsel %vm2429, %v2406, 0.0
      %v2437 = vsel %vm2430, %v2415, 0.0
      %v2438 = vsel %vm2431, %v2424, 0.0
      %v2446 = vsel %vm1651, %v2433, %v2432
      %v2447 = vsel %vm1654, %v2434, %v2446
      %v2448 = vsel %vm1657, %v2435, %v2447
      %v2449 = vsel %vm1660, %v2436, %v2448
      %v2450 = vsel %vm1663, %v2437, %v2449
      %v2451 = vsel %vm1666, %v2438, %v2450
      %2453 = vst.msk [vmem:[%s150 + $0x1c] sm:$0x7f] %vm1972, %v2451
      %s2454 = sld [smem:[#allocation4 + %s1142]]
      %s2455 = sld [smem:[#allocation5 + %s1142]]
      %v2456 = vstv %s2454
      %vm2457 = vcmp.ge.s32.totalorder %v184, %v2456
      %vm2458 = vcmp.ge.s32.totalorder %v185, %v2456
      %v2459 = vstv %s2455
      %vm2460 = vcmp.lt.s32.totalorder %v184, %v2459
      %vm2461 = vcmp.lt.s32.totalorder %v185, %v2459
      %vm2462 = vmand %vm2457, %vm2460
      %vm2463 = vmand %vm2458, %vm2461
      %v2464 = vsel %vm2462, 1, 0
      %v2465 = vsel %vm2463, 1, 0
      %vm2466 = vcmp.eq.s32.totalorder %v2464, 1
      %vm2467 = vcmp.eq.s32.totalorder %v2465, 1
      %v2468 = vsel %vm2466, %v1670, -3.4028235e+38
      %v2469 = vsel %vm2467, %v1684, -3.4028235e+38
      %v2470 = vsel %vm2466, %v1698, -3.4028235e+38
      %v2471 = vsel %vm2467, %v1712, -3.4028235e+38
      %v2472 = vsel %vm2466, %v1726, -3.4028235e+38
      %v2473 = vsel %vm2467, %v1740, -3.4028235e+38
      %v2474 = vsel %vm2466, %v1754, -3.4028235e+38
      %v2475 = vsel %vm2467, %v1768, -3.4028235e+38
      %v2476 = vsel %vm2466, %v1782, -3.4028235e+38
      %v2477 = vsel %vm2467, %v1796, -3.4028235e+38
      %v2478 = vsel %vm2466, %v1810, -3.4028235e+38
      %v2479 = vsel %vm2467, %v1824, -3.4028235e+38
      %v2480 = vsel %vm2466, %v1838, -3.4028235e+38
      %v2481 = vsel %vm2467, %v1852, -3.4028235e+38
      %v2482 = vsel %vm233, %v2468, -inf
      %v2483 = vsel %vm233, %v2469, -inf
      %v2484 = vmax.f32 %v2482, %v2483
      %v2485 = vrot.slane %v2484, 4
      %v2486 = vmax.f32 %v2484, %v2485
      %v2487 = vrot.slane %v2486, 2
      %v2488 = vmax.f32 %v2486, %v2487
      %v2489 = vrot.slane %v2488, 1
      %v2490 = vmax.f32 %v2488, %v2489
      %v2491 = vsel %vm233, %v2470, -inf
      %v2492 = vsel %vm233, %v2471, -inf
      %v2493 = vmax.f32 %v2491, %v2492
      %v2494 = vrot.slane %v2493, 4
      %v2495 = vmax.f32 %v2493, %v2494
      %v2496 = vrot.slane %v2495, 2
      %v2497 = vmax.f32 %v2495, %v2496
      %v2498 = vrot.slane %v2497, 1
      %v2499 = vmax.f32 %v2497, %v2498
      %v2500 = vsel %vm233, %v2472, -inf
      %v2501 = vsel %vm233, %v2473, -inf
      %v2502 = vmax.f32 %v2500, %v2501
      %v2503 = vrot.slane %v2502, 4
      %v2504 = vmax.f32 %v2502, %v2503
      %v2505 = vrot.slane %v2504, 2
      %v2506 = vmax.f32 %v2504, %v2505
      %v2507 = vrot.slane %v2506, 1
      %v2508 = vmax.f32 %v2506, %v2507
      %v2509 = vsel %vm233, %v2474, -inf
      %v2510 = vsel %vm233, %v2475, -inf
      %v2511 = vmax.f32 %v2509, %v2510
      %v2512 = vrot.slane %v2511, 4
      %v2513 = vmax.f32 %v2511, %v2512
      %v2514 = vrot.slane %v2513, 2
      %v2515 = vmax.f32 %v2513, %v2514
      %v2516 = vrot.slane %v2515, 1
      %v2517 = vmax.f32 %v2515, %v2516
      %v2518 = vsel %vm233, %v2476, -inf
      %v2519 = vsel %vm233, %v2477, -inf
      %v2520 = vmax.f32 %v2518, %v2519
      %v2521 = vrot.slane %v2520, 4
      %v2522 = vmax.f32 %v2520, %v2521
      %v2523 = vrot.slane %v2522, 2
      %v2524 = vmax.f32 %v2522, %v2523
      %v2525 = vrot.slane %v2524, 1
      %v2526 = vmax.f32 %v2524, %v2525
      %v2527 = vsel %vm233, %v2478, -inf
      %v2528 = vsel %vm233, %v2479, -inf
      %v2529 = vmax.f32 %v2527, %v2528
      %v2530 = vrot.slane %v2529, 4
      %v2531 = vmax.f32 %v2529, %v2530
      %v2532 = vrot.slane %v2531, 2
      %v2533 = vmax.f32 %v2531, %v2532
      %v2534 = vrot.slane %v2533, 1
      %v2535 = vmax.f32 %v2533, %v2534
      %v2536 = vsel %vm233, %v2480, -inf
      %v2537 = vsel %vm233, %v2481, -inf
      %v2538 = vmax.f32 %v2536, %v2537
      %v2539 = vrot.slane %v2538, 4
      %v2540 = vmax.f32 %v2538, %v2539
      %v2541 = vrot.slane %v2540, 2
      %v2542 = vmax.f32 %v2540, %v2541
      %v2543 = vrot.slane %v2542, 1
      %v2544 = vmax.f32 %v2542, %v2543
      %vm2545 = vcmp.gt.f32.partialorder %v2490, -3.4028235e+38
      %vm2546 = vcmp.gt.f32.partialorder %v2499, -3.4028235e+38
      %vm2547 = vcmp.gt.f32.partialorder %v2508, -3.4028235e+38
      %vm2548 = vcmp.gt.f32.partialorder %v2517, -3.4028235e+38
      %vm2549 = vcmp.gt.f32.partialorder %v2526, -3.4028235e+38
      %vm2550 = vcmp.gt.f32.partialorder %v2535, -3.4028235e+38
      %vm2551 = vcmp.gt.f32.partialorder %v2544, -3.4028235e+38
      %v2552 = vsel %vm2545, %v2490, 0.0
      %v2553 = vsel %vm2546, %v2499, 0.0
      %v2554 = vsel %vm2547, %v2508, 0.0
      %v2555 = vsel %vm2548, %v2517, 0.0
      %v2556 = vsel %vm2549, %v2526, 0.0
      %v2557 = vsel %vm2550, %v2535, 0.0
      %v2558 = vsel %vm2551, %v2544, 0.0
      %v2566 = vsel %vm1651, %v2553, %v2552
      %v2567 = vsel %vm1654, %v2554, %v2566
      %v2568 = vsel %vm1657, %v2555, %v2567
      %v2569 = vsel %vm1660, %v2556, %v2568
      %v2570 = vsel %vm1663, %v2557, %v2569
      %v2571 = vsel %vm1666, %v2558, %v2570
      %2573 = vst.msk [vmem:[%s150 + $0x23] sm:$0x7f] %vm1972, %v2571
      %s2574 = sld [smem:[#allocation4 + %s1333]]
      %s2575 = sld [smem:[#allocation5 + %s1333]]
      %v2576 = vstv %s2574
      %vm2577 = vcmp.ge.s32.totalorder %v184, %v2576
      %vm2578 = vcmp.ge.s32.totalorder %v185, %v2576
      %v2579 = vstv %s2575
      %vm2580 = vcmp.lt.s32.totalorder %v184, %v2579
      %vm2581 = vcmp.lt.s32.totalorder %v185, %v2579
      %vm2582 = vmand %vm2577, %vm2580
      %vm2583 = vmand %vm2578, %vm2581
      %v2584 = vsel %vm2582, 1, 0
      %v2585 = vsel %vm2583, 1, 0
      %vm2586 = vcmp.eq.s32.totalorder %v2584, 1
      %vm2587 = vcmp.eq.s32.totalorder %v2585, 1
      %v2588 = vsel %vm2586, %v1670, -3.4028235e+38
      %v2589 = vsel %vm2587, %v1684, -3.4028235e+38
      %v2590 = vsel %vm2586, %v1698, -3.4028235e+38
      %v2591 = vsel %vm2587, %v1712, -3.4028235e+38
      %v2592 = vsel %vm2586, %v1726, -3.4028235e+38
      %v2593 = vsel %vm2587, %v1740, -3.4028235e+38
      %v2594 = vsel %vm2586, %v1754, -3.4028235e+38
      %v2595 = vsel %vm2587, %v1768, -3.4028235e+38
      %v2596 = vsel %vm2586, %v1782, -3.4028235e+38
      %v2597 = vsel %vm2587, %v1796, -3.4028235e+38
      %v2598 = vsel %vm2586, %v1810, -3.4028235e+38
      %v2599 = vsel %vm2587, %v1824, -3.4028235e+38
      %v2600 = vsel %vm2586, %v1838, -3.4028235e+38
      %v2601 = vsel %vm2587, %v1852, -3.4028235e+38
      %v2602 = vsel %vm233, %v2588, -inf
      %v2603 = vsel %vm233, %v2589, -inf
      %v2604 = vmax.f32 %v2602, %v2603
      %v2605 = vrot.slane %v2604, 4
      %v2606 = vmax.f32 %v2604, %v2605
      %v2607 = vrot.slane %v2606, 2
      %v2608 = vmax.f32 %v2606, %v2607
      %v2609 = vrot.slane %v2608, 1
      %v2610 = vmax.f32 %v2608, %v2609
      %v2611 = vsel %vm233, %v2590, -inf
      %v2612 = vsel %vm233, %v2591, -inf
      %v2613 = vmax.f32 %v2611, %v2612
      %v2614 = vrot.slane %v2613, 4
      %v2615 = vmax.f32 %v2613, %v2614
      %v2616 = vrot.slane %v2615, 2
      %v2617 = vmax.f32 %v2615, %v2616
      %v2618 = vrot.slane %v2617, 1
      %v2619 = vmax.f32 %v2617, %v2618
      %v2620 = vsel %vm233, %v2592, -inf
      %v2621 = vsel %vm233, %v2593, -inf
      %v2622 = vmax.f32 %v2620, %v2621
      %v2623 = vrot.slane %v2622, 4
      %v2624 = vmax.f32 %v2622, %v2623
      %v2625 = vrot.slane %v2624, 2
      %v2626 = vmax.f32 %v2624, %v2625
      %v2627 = vrot.slane %v2626, 1
      %v2628 = vmax.f32 %v2626, %v2627
      %v2629 = vsel %vm233, %v2594, -inf
      %v2630 = vsel %vm233, %v2595, -inf
      %v2631 = vmax.f32 %v2629, %v2630
      %v2632 = vrot.slane %v2631, 4
      %v2633 = vmax.f32 %v2631, %v2632
      %v2634 = vrot.slane %v2633, 2
      %v2635 = vmax.f32 %v2633, %v2634
      %v2636 = vrot.slane %v2635, 1
      %v2637 = vmax.f32 %v2635, %v2636
      %v2638 = vsel %vm233, %v2596, -inf
      %v2639 = vsel %vm233, %v2597, -inf
      %v2640 = vmax.f32 %v2638, %v2639
      %v2641 = vrot.slane %v2640, 4
      %v2642 = vmax.f32 %v2640, %v2641
      %v2643 = vrot.slane %v2642, 2
      %v2644 = vmax.f32 %v2642, %v2643
      %v2645 = vrot.slane %v2644, 1
      %v2646 = vmax.f32 %v2644, %v2645
      %v2647 = vsel %vm233, %v2598, -inf
      %v2648 = vsel %vm233, %v2599, -inf
      %v2649 = vmax.f32 %v2647, %v2648
      %v2650 = vrot.slane %v2649, 4
      %v2651 = vmax.f32 %v2649, %v2650
      %v2652 = vrot.slane %v2651, 2
      %v2653 = vmax.f32 %v2651, %v2652
      %v2654 = vrot.slane %v2653, 1
      %v2655 = vmax.f32 %v2653, %v2654
      %v2656 = vsel %vm233, %v2600, -inf
      %v2657 = vsel %vm233, %v2601, -inf
      %v2658 = vmax.f32 %v2656, %v2657
      %v2659 = vrot.slane %v2658, 4
      %v2660 = vmax.f32 %v2658, %v2659
      %v2661 = vrot.slane %v2660, 2
      %v2662 = vmax.f32 %v2660, %v2661
      %v2663 = vrot.slane %v2662, 1
      %v2664 = vmax.f32 %v2662, %v2663
      %vm2665 = vcmp.gt.f32.partialorder %v2610, -3.4028235e+38
      %vm2666 = vcmp.gt.f32.partialorder %v2619, -3.4028235e+38
      %vm2667 = vcmp.gt.f32.partialorder %v2628, -3.4028235e+38
      %vm2668 = vcmp.gt.f32.partialorder %v2637, -3.4028235e+38
      %vm2669 = vcmp.gt.f32.partialorder %v2646, -3.4028235e+38
      %vm2670 = vcmp.gt.f32.partialorder %v2655, -3.4028235e+38
      %vm2671 = vcmp.gt.f32.partialorder %v2664, -3.4028235e+38
      %v2672 = vsel %vm2665, %v2610, 0.0
      %v2673 = vsel %vm2666, %v2619, 0.0
      %v2674 = vsel %vm2667, %v2628, 0.0
      %v2675 = vsel %vm2668, %v2637, 0.0
      %v2676 = vsel %vm2669, %v2646, 0.0
      %v2677 = vsel %vm2670, %v2655, 0.0
      %v2678 = vsel %vm2671, %v2664, 0.0
      %v2686 = vsel %vm1651, %v2673, %v2672
      %v2687 = vsel %vm1654, %v2674, %v2686
      %v2688 = vsel %vm1657, %v2675, %v2687
      %v2689 = vsel %vm1660, %v2676, %v2688
      %v2690 = vsel %vm1663, %v2677, %v2689
      %v2691 = vsel %vm1666, %v2678, %v2690
      %2693 = vst.msk [vmem:[%s150 + $0x2a] sm:$0x7f] %vm1972, %v2691
      %p2694 = scmp.lt.s32.totalorder %s39, 7
      %s2695 = scalar_select %p2694, %s39, 7
      %s2696 = smul.addr %s2695, 7
      %s2697 = smul.addr %s2696, 8
      %s2698 = scalar_lea.vmem %s6, %s2697
      // Predicated region
      $region25: #{tpu_custom_call.1} parent=23 // pred_check
        %p2699 = pneg %p85
      $region26: #{tpu_custom_call.1} parent=23 // pred_check_branch
        %2701 = sbr.rel (%p2699) target = $region28
      $region27: #{tpu_custom_call.1} parent=23 // pred_region
        _
      $region28: #{tpu_custom_call.1} parent=23 // pred_fallthru
        _
    $region24: #{tpu_custom_call.1} parent=5 // pred_fallthru
      _
    %p2702 = scmp.le.s32.totalorder 2, %s34
    // Predicated region
    $region29: #{tpu_custom_call.1} parent=5 // pred_check
      %p2703 = pneg %p2702
    $region30: #{tpu_custom_call.1} parent=5 // pred_check_branch
      %2705 = sbr.rel (%p2703) target = $region32
    $region31: #{tpu_custom_call.1} parent=5 // pred_region
      %s2706 = ssub.s32 %s34, 2
      // Predicated region
      $region33: #{tpu_custom_call.1} parent=31 // pred_check
        %p2707 = pneg %p91
      $region34: #{tpu_custom_call.1} parent=31 // pred_check_branch
        %2709 = sbr.rel (%p2707) target = $region36
      $region35: #{tpu_custom_call.1} parent=31 // pred_region
        %p2710 = scmp.lt.s32.totalorder %s40, 7
        %s2711 = scalar_select %p2710, %s40, 7
        %s2712 = smul.addr %s2711, 7
        %s2713 = smul.addr %s2712, 8
        %s2714 = scalar_lea.vmem %s6, %s2713
      $region36: #{tpu_custom_call.1} parent=31 // pred_fallthru
        _
    $region32: #{tpu_custom_call.1} parent=5 // pred_fallthru
      _
  $region6: #{tpu_custom_call.1} parent=0 // loop_footer
    %s38 = sadd.s32 1, %s34
  $region7: #{tpu_custom_call.1} parent=0 // loop_footer_branch
    %33 = sbr.rel target = $region3
  $region8: #{tpu_custom_call.1} parent=0 // loop_exit
    _

</llo_original>
